<compile_context>
chip_gen: v7x
topology: tpu7x:2x2x1
jax: 0.10.0
libtpu: 0.0.40
codegen_flags: <defaults>
</compile_context>

<pallas_src>
import math
from functools import partial

import jax
import jax.numpy as jnp
from jax.experimental import pallas as pl
from jax.experimental.pallas import tpu as pltpu


# ------------------- OS-CNN configuration helpers (mirror the PyTorch code) -------------------

def calculate_mask_index(kernel_length_now, largest_kernel_length):
    right = math.ceil((largest_kernel_length - 1) / 2) - math.ceil((kernel_length_now - 1) / 2)
    left = largest_kernel_length - kernel_length_now - right
    return left, left + kernel_length_now


def get_prime_number_in_a_range(start, end):
    primes = []
    for val in range(start, end + 1):
        is_prime = True
        for n in range(2, val):
            if val % n == 0:
                is_prime = False
                break
        if is_prime:
            primes.append(val)
    return primes


def generate_layer_parameter_list(start, end, parameter_number_of_layer_list, in_channel=1):
    prime_list = get_prime_number_in_a_range(start, end)
    input_in_channel = in_channel
    layer_parameter_list = []
    for p in parameter_number_of_layer_list:
        out_channel = int(p / (in_channel * sum(prime_list)))
        layer_parameter_list.append([(in_channel, out_channel, prime) for prime in prime_list])
        in_channel = len(prime_list) * out_channel
    first_out_channel = len(prime_list) * int(
        parameter_number_of_layer_list[0] / (input_in_channel * sum(prime_list)))
    layer_parameter_list.append([(in_channel, first_out_channel, start),
                                 (in_channel, first_out_channel, start + 1)])
    return layer_parameter_list


# ------------------- deterministic parameter construction (synthetic init, hoisted prep) -------------------

def make_layer_params(key, layer_parameters, lane_pad):
    """One OS block: pre-masked Conv1d weights folded into an im2col matrix + BN params.

    The in-forward `weight * mask` of the PyTorch module is the identity on a freshly
    initialized (zero-embedded) weight, so masking is hoisted here (done once).
    """
    max_k = layer_parameters[-1][-1]
    c_in = layer_parameters[0][0]
    weights, biases = [], []
    for (cin, cout, kk) in layer_parameters:
        key, kw, kb = jax.random.split(key, 3)
        ind_l, ind_r = calculate_mask_index(kk, max_k)
        bound = 1.0 / math.sqrt(cin * kk)          # torch Conv1d default-init bound
        w_small = jax.random.uniform(kw, (cout, cin, kk), jnp.float32, -bound, bound)
        big = jnp.zeros((cout, cin, max_k), jnp.float32).at[:, :, ind_l:ind_r].set(w_small)
        b = jax.random.uniform(kb, (cout,), jnp.float32, -bound, bound)
        weights.append(big)
        biases.append(b)
    w = jnp.concatenate(weights, axis=0)           # (C_out, C_in, max_k), already masked
    b = jnp.concatenate(biases, axis=0)            # (C_out,)
    c_out = w.shape[0]
    CP = lane_pad

    # im2col weight: rows are [tap0 channels | tap1 channels | ...], lane-padded, bf16 for the MXU.
    w_t = jnp.transpose(w, (2, 1, 0))              # (K, C_in, C_out)
    w_pad = jnp.zeros((max_k, CP, CP), jnp.float32).at[:, :c_in, :c_out].set(w_t)
    w_col = w_pad.reshape(max_k * CP, CP).astype(jnp.bfloat16)

    bias_pad = jnp.zeros((1, CP), jnp.float32).at[0, :c_out].set(b)
    gamma_pad = jnp.ones((1, CP), jnp.float32)     # BatchNorm1d weight init = 1 (pad value inert)
    beta_pad = jnp.zeros((1, CP), jnp.float32)     # BatchNorm1d bias init = 0 (keeps pad lanes at 0)

    params = dict(w_col=w_col, bias=bias_pad, gamma=gamma_pad, beta=beta_pad,
                  K=max_k, left=(max_k - 1) // 2, c_out=c_out)
    return key, params


# ------------------------------------ the fused Pallas kernel ------------------------------------

def _oscnn_fused_kernel(*refs, layer_cfgs, L, eps, few_shot):
    # refs: x_ref, [w, bias, gamma, beta] * n_layers, (hidden_w, hidden_b)?, o_ref, xcol_scratch
    n_layers = len(layer_cfgs)
    x_ref = refs[0]
    layer_refs = [refs[1 + 4 * i: 1 + 4 * i + 4] for i in range(n_layers)]
    idx = 1 + 4 * n_layers
    if few_shot:
        hw_ref = hb_ref = None
    else:
        hw_ref, hb_ref = refs[idx], refs[idx + 1]
        idx += 2
    o_ref = refs[idx]
    xcol_ref = refs[idx + 1]

    B = x_ref.shape[0]
    CP = x_ref.shape[-1]                           # lane-padded channel width (128)
    inv_n = 1.0 / float(B * L)

    x = x_ref[...]                                 # (B, L, CP) f32, channels-last

    for (K, left), (w_ref, b_ref, g_ref, be_ref) in zip(layer_cfgs, layer_refs):
        # ---- im2col into VMEM scratch: xcol[:, t, k*CP:(k+1)*CP] = x[:, t + k - left, :] ----
        # Zero borders implement nn.ConstantPad1d(((K-1)//2, K//2), 0).
        xcol_ref[...] = jnp.zeros_like(xcol_ref)
        for k in range(K):                         # static unroll, K <= 7 here
            s = k - left
            t0, t1 = max(0, -s), min(L, L - s)
            if t1 > t0:
                xcol_ref[:, t0:t1, k * CP:(k + 1) * CP] = x[:, t0 + s:t1 + s, :]
        xcol = xcol_ref[:, :, :K * CP].reshape(B * L, K * CP)

        # ---- masked Conv1d as ONE bf16 MXU matmul (f32 accumulate) + bias ----
        acc = jnp.dot(xcol.astype(jnp.bfloat16), w_ref[...],
                      preferred_element_type=jnp.float32)        # (B*L, CP)
        acc = acc + b_ref[...]

        # ---- BatchNorm1d (training mode): single-pass batch stats, biased variance ----
        mean = jnp.sum(acc, axis=0, keepdims=True) * inv_n
        var = jnp.sum(acc * acc, axis=0, keepdims=True) * inv_n - mean * mean
        y = (acc - mean) * jax.lax.rsqrt(var + eps)
        y = y * g_ref[...] + be_ref[...]

        # ---- ReLU; back to (B, L, CP) for the next block ----
        x = jnp.maximum(y, 0.0).reshape(B, L, CP)

    # ---- AdaptiveAvgPool1d(1) + squeeze(-1) (+ Linear head) ----
    pooled = jnp.mean(x, axis=1)                   # (B, CP)
    if few_shot:
        o_ref[...] = pooled
    else:
        o_ref[...] = jnp.dot(pooled, hw_ref[...],
                             preferred_element_type=jnp.float32) + hb_ref[...]


def _full_spec(shape):
    nd = len(shape)
    return pl.BlockSpec(shape, lambda *_: (0,) * nd)


def oscnn_fused_forward(x_blc_pad, layer_params, hidden_w, hidden_b, *, few_shot, k_max):
    """x_blc_pad: (B, L, CP) channels-last, already lane-padded to CP."""
    B, L, CP = x_blc_pad.shape

    inputs = [x_blc_pad]
    in_specs = [_full_spec((B, L, CP))]
    layer_cfgs = []
    for p in layer_params:
        inputs += [p['w_col'], p['bias'], p['gamma'], p['beta']]
        in_specs += [_full_spec(p['w_col'].shape), _full_spec((1, CP)),
                     _full_spec((1, CP)), _full_spec((1, CP))]
        layer_cfgs.append((p['K'], p['left']))
    if not few_shot:
        inputs += [hidden_w, hidden_b]
        in_specs += [_full_spec((CP, CP)), _full_spec((1, CP))]

    kernel = partial(_oscnn_fused_kernel, layer_cfgs=tuple(layer_cfgs),
                     L=L, eps=1e-5, few_shot=few_shot)

    return pl.pallas_call(
        kernel,
        out_shape=jax.ShapeDtypeStruct((B, CP), jnp.float32),
        grid=(1,),
        in_specs=in_specs,
        out_specs=_full_spec((B, CP)),
        scratch_shapes=[pltpu.VMEM((B, L, k_max * CP), jnp.float32)],  # im2col scratch
        compiler_params=pltpu.CompilerParams(
            dimension_semantics=("arbitrary",),
            vmem_limit_bytes=32 * 1024 * 1024),
    )(*inputs)


# ------------------------------------ full model ------------------------------------

class OSCNNPallas:
    def __init__(self, key, n_class, input_channel, receptive_field_shape,
                 start_kernel_size=1, parameter_number_of_layer_list=(360, 720),
                 few_shot=False):
        self.few_shot = few_shot
        self.n_class = n_class
        lp_list = generate_layer_parameter_list(
            start_kernel_size, receptive_field_shape,
            list(parameter_number_of_layer_list), in_channel=input_channel)

        # lane padding: cover every channel count (and n_class) with a multiple of 128
        widths = [input_channel] + [sum(t[1] for t in lp) for lp in lp_list] + [n_class]
        self.CP = 128 * ((max(widths) + 127) // 128)

        self.layer_params = []
        for lp in lp_list:
            key, p = make_layer_params(key, lp, self.CP)
            self.layer_params.append(p)
        self.k_max = max(p['K'] for p in self.layer_params)
        self.final_channels = sum(t[1] for t in lp_list[-1])

        # Linear head (torch default init), padded to lane width, prepped once.
        out_ch = self.final_channels
        key, kw, kb = jax.random.split(key, 3)
        bound = 1.0 / math.sqrt(out_ch)
        hw = jax.random.uniform(kw, (out_ch, n_class), jnp.float32, -bound, bound)
        hb = jax.random.uniform(kb, (n_class,), jnp.float32, -bound, bound)
        self.hidden_w = jnp.zeros((self.CP, self.CP), jnp.float32).at[:out_ch, :n_class].set(hw)
        self.hidden_b = jnp.zeros((1, self.CP), jnp.float32).at[0, :n_class].set(hb)

    def __call__(self, x_ncl):
        # x_ncl: (B, C_in, L) as in PyTorch; go channels-last and lane-pad the channels once.
        B, c_in, L = x_ncl.shape
        x = jnp.transpose(x_ncl, (0, 2, 1)).astype(jnp.float32)        # (B, L, C_in)
        if c_in < self.CP:
            x = jnp.pad(x, ((0, 0), (0, 0), (0, self.CP - c_in)))
        out_pad = oscnn_fused_forward(
            x, self.layer_params,
            None if self.few_shot else self.hidden_w,
            None if self.few_shot else self.hidden_b,
            few_shot=self.few_shot, k_max=self.k_max)
        if self.few_shot:
            return out_pad[:, :self.final_channels]   # pooled features (no Linear)
        return out_pad[:, :self.n_class]


if __name__ == "__main__":
    key = jax.random.PRNGKey(0)
    key, kx, kp = jax.random.split(key, 3)

    # Small shapes consistent with the module: batch=2, input_channel=4, seq length=16.
    B, C_in, L = 2, 4, 16
    n_class = 3
    x = jax.random.normal(kx, (B, C_in, L), jnp.float32)

    # Small receptive field / parameter budget so channel counts stay tiny:
    #   primes in [1, 8] -> [1, 2, 3, 5, 7]; blocks: (4->25, K=7), (25->5, K=7), (5->50, K=2),
    #   Linear 50->3.
    model = OSCNNPallas(kp, n_class=n_class, input_channel=C_in,
                        receptive_field_shape=8, start_kernel_size=1,
                        parameter_number_of_layer_list=(360, 720), few_shot=False)

    out = model(x)
    out = jax.block_until_ready(out)
    assert out.shape == (B, n_class), out.shape
    assert bool(jnp.all(jnp.isfinite(out)))
    print("KERNEL_OK")
</pallas_src>

<mosaic_0001>
module attributes {stable_mosaic.version = 11 : i64} {
  func.func @_oscnn_fused_kernel(%arg0: i32, %arg1: memref<2x16x128xf32, #tpu.memory_space<vmem>>, %arg2: memref<896x128xbf16, #tpu.memory_space<vmem>>, %arg3: memref<1x128xf32, #tpu.memory_space<vmem>>, %arg4: memref<1x128xf32, #tpu.memory_space<vmem>>, %arg5: memref<1x128xf32, #tpu.memory_space<vmem>>, %arg6: memref<896x128xbf16, #tpu.memory_space<vmem>>, %arg7: memref<1x128xf32, #tpu.memory_space<vmem>>, %arg8: memref<1x128xf32, #tpu.memory_space<vmem>>, %arg9: memref<1x128xf32, #tpu.memory_space<vmem>>, %arg10: memref<256x128xbf16, #tpu.memory_space<vmem>>, %arg11: memref<1x128xf32, #tpu.memory_space<vmem>>, %arg12: memref<1x128xf32, #tpu.memory_space<vmem>>, %arg13: memref<1x128xf32, #tpu.memory_space<vmem>>, %arg14: memref<128x128xf32, #tpu.memory_space<vmem>>, %arg15: memref<1x128xf32, #tpu.memory_space<vmem>>, %arg16: memref<2x128xf32, #tpu.memory_space<vmem>>, %arg17: memref<2x16x896xf32, #tpu.memory_space<vmem>>) attributes {dimension_semantics = [#tpu.dimension_semantics<arbitrary>], iteration_bounds = array<i64: 1>, scalar_prefetch = 0 : i64, scratch_operands = 1 : i64, tpu.core_type = #tpu.core_type<tc>, window_params = [{pipeline_mode = #tpu.pipeline_mode<synchronous>, transform_indices = @transform_0, window_bounds = array<i64: 2, 16, 128>}, {pipeline_mode = #tpu.pipeline_mode<synchronous>, transform_indices = @transform_1, window_bounds = array<i64: 896, 128>}, {pipeline_mode = #tpu.pipeline_mode<synchronous>, transform_indices = @transform_2, window_bounds = array<i64: 1, 128>}, {pipeline_mode = #tpu.pipeline_mode<synchronous>, transform_indices = @transform_3, window_bounds = array<i64: 1, 128>}, {pipeline_mode = #tpu.pipeline_mode<synchronous>, transform_indices = @transform_4, window_bounds = array<i64: 1, 128>}, {pipeline_mode = #tpu.pipeline_mode<synchronous>, transform_indices = @transform_5, window_bounds = array<i64: 896, 128>}, {pipeline_mode = #tpu.pipeline_mode<synchronous>, transform_indices = @transform_6, window_bounds = array<i64: 1, 128>}, {pipeline_mode = #tpu.pipeline_mode<synchronous>, transform_indices = @transform_7, window_bounds = array<i64: 1, 128>}, {pipeline_mode = #tpu.pipeline_mode<synchronous>, transform_indices = @transform_8, window_bounds = array<i64: 1, 128>}, {pipeline_mode = #tpu.pipeline_mode<synchronous>, transform_indices = @transform_9, window_bounds = array<i64: 256, 128>}, {pipeline_mode = #tpu.pipeline_mode<synchronous>, transform_indices = @transform_10, window_bounds = array<i64: 1, 128>}, {pipeline_mode = #tpu.pipeline_mode<synchronous>, transform_indices = @transform_11, window_bounds = array<i64: 1, 128>}, {pipeline_mode = #tpu.pipeline_mode<synchronous>, transform_indices = @transform_12, window_bounds = array<i64: 1, 128>}, {pipeline_mode = #tpu.pipeline_mode<synchronous>, transform_indices = @transform_13, window_bounds = array<i64: 128, 128>}, {pipeline_mode = #tpu.pipeline_mode<synchronous>, transform_indices = @transform_14, window_bounds = array<i64: 1, 128>}, {pipeline_mode = #tpu.pipeline_mode<synchronous>, transform_indices = @transform_15, window_bounds = array<i64: 2, 128>}]} {
    %c0 = arith.constant 0 : index
    %c0_0 = arith.constant 0 : index
    %c0_1 = arith.constant 0 : index
    %0 = vector.load %arg1[%c0, %c0_0, %c0_1] : memref<2x16x128xf32, #tpu.memory_space<vmem>>, vector<2x16x128xf32>
    %cst = arith.constant 0.000000e+00 : f32
    %1 = vector.broadcast %cst : f32 to vector<2x16x896xf32>
    %c0_2 = arith.constant 0 : index
    %c0_3 = arith.constant 0 : index
    %c0_4 = arith.constant 0 : index
    %2 = vector.load %arg17[%c0_2, %c0_3, %c0_4] : memref<2x16x896xf32, #tpu.memory_space<vmem>>, vector<2x16x896xf32>
    tpu.vector_store %arg17[%c0_2, %c0_3, %c0_4], %1 {strides = array<i32>} : memref<2x16x896xf32, #tpu.memory_space<vmem>>, vector<2x16x896xf32>,
    %3 = vector.extract_strided_slice %0 {offsets = [0, 0, 0], sizes = [2, 13, 128], strides = [1, 1, 1]} : vector<2x16x128xf32> to vector<2x13x128xf32>
    %c0_5 = arith.constant 0 : index
    %c3 = arith.constant 3 : index
    %c0_6 = arith.constant 0 : index
    %4 = vector.load %arg17[%c0_5, %c3, %c0_6] : memref<2x16x896xf32, #tpu.memory_space<vmem>>, vector<2x13x128xf32>
    tpu.vector_store %arg17[%c0_5, %c3, %c0_6], %3 {strides = array<i32>} : memref<2x16x896xf32, #tpu.memory_space<vmem>>, vector<2x13x128xf32>,
    %5 = vector.extract_strided_slice %0 {offsets = [0, 0, 0], sizes = [2, 14, 128], strides = [1, 1, 1]} : vector<2x16x128xf32> to vector<2x14x128xf32>
    %c0_7 = arith.constant 0 : index
    %c2 = arith.constant 2 : index
    %c128 = arith.constant 128 : index
    %6 = vector.load %arg17[%c0_7, %c2, %c128] : memref<2x16x896xf32, #tpu.memory_space<vmem>>, vector<2x14x128xf32>
    tpu.vector_store %arg17[%c0_7, %c2, %c128], %5 {strides = array<i32>} : memref<2x16x896xf32, #tpu.memory_space<vmem>>, vector<2x14x128xf32>,
    %7 = vector.extract_strided_slice %0 {offsets = [0, 0, 0], sizes = [2, 15, 128], strides = [1, 1, 1]} : vector<2x16x128xf32> to vector<2x15x128xf32>
    %c0_8 = arith.constant 0 : index
    %c1 = arith.constant 1 : index
    %c256 = arith.constant 256 : index
    %8 = vector.load %arg17[%c0_8, %c1, %c256] : memref<2x16x896xf32, #tpu.memory_space<vmem>>, vector<2x15x128xf32>
    tpu.vector_store %arg17[%c0_8, %c1, %c256], %7 {strides = array<i32>} : memref<2x16x896xf32, #tpu.memory_space<vmem>>, vector<2x15x128xf32>,
    %c0_9 = arith.constant 0 : index
    %c0_10 = arith.constant 0 : index
    %c384 = arith.constant 384 : index
    %9 = vector.load %arg17[%c0_9, %c0_10, %c384] : memref<2x16x896xf32, #tpu.memory_space<vmem>>, vector<2x16x128xf32>
    tpu.vector_store %arg17[%c0_9, %c0_10, %c384], %0 {strides = array<i32>} : memref<2x16x896xf32, #tpu.memory_space<vmem>>, vector<2x16x128xf32>,
    %10 = vector.extract_strided_slice %0 {offsets = [0, 1, 0], sizes = [2, 15, 128], strides = [1, 1, 1]} : vector<2x16x128xf32> to vector<2x15x128xf32>
    %c0_11 = arith.constant 0 : index
    %c0_12 = arith.constant 0 : index
    %c512 = arith.constant 512 : index
    %11 = vector.load %arg17[%c0_11, %c0_12, %c512] : memref<2x16x896xf32, #tpu.memory_space<vmem>>, vector<2x15x128xf32>
    tpu.vector_store %arg17[%c0_11, %c0_12, %c512], %10 {strides = array<i32>} : memref<2x16x896xf32, #tpu.memory_space<vmem>>, vector<2x15x128xf32>,
    %12 = vector.extract_strided_slice %0 {offsets = [0, 2, 0], sizes = [2, 14, 128], strides = [1, 1, 1]} : vector<2x16x128xf32> to vector<2x14x128xf32>
    %c0_13 = arith.constant 0 : index
    %c0_14 = arith.constant 0 : index
    %c640 = arith.constant 640 : index
    %13 = vector.load %arg17[%c0_13, %c0_14, %c640] : memref<2x16x896xf32, #tpu.memory_space<vmem>>, vector<2x14x128xf32>
    tpu.vector_store %arg17[%c0_13, %c0_14, %c640], %12 {strides = array<i32>} : memref<2x16x896xf32, #tpu.memory_space<vmem>>, vector<2x14x128xf32>,
    %14 = vector.extract_strided_slice %0 {offsets = [0, 3, 0], sizes = [2, 13, 128], strides = [1, 1, 1]} : vector<2x16x128xf32> to vector<2x13x128xf32>
    %c0_15 = arith.constant 0 : index
    %c0_16 = arith.constant 0 : index
    %c768 = arith.constant 768 : index
    %15 = vector.load %arg17[%c0_15, %c0_16, %c768] : memref<2x16x896xf32, #tpu.memory_space<vmem>>, vector<2x13x128xf32>
    tpu.vector_store %arg17[%c0_15, %c0_16, %c768], %14 {strides = array<i32>} : memref<2x16x896xf32, #tpu.memory_space<vmem>>, vector<2x13x128xf32>,
    %c0_17 = arith.constant 0 : index
    %c0_18 = arith.constant 0 : index
    %c0_19 = arith.constant 0 : index
    %16 = vector.load %arg17[%c0_17, %c0_18, %c0_19] : memref<2x16x896xf32, #tpu.memory_space<vmem>>, vector<2x16x896xf32>
    %17 = vector.shape_cast %16 : vector<2x16x896xf32> to vector<32x896xf32>
    %18 = arith.truncf %17 : vector<32x896xf32> to vector<32x896xbf16>
    %c0_20 = arith.constant 0 : index
    %c0_21 = arith.constant 0 : index
    %19 = vector.load %arg2[%c0_20, %c0_21] : memref<896x128xbf16, #tpu.memory_space<vmem>>, vector<896x128xbf16>
    %cst_22 = arith.constant dense<0.000000e+00> : vector<32x128xf32>
    %20 = tpu.matmul %18, %19, %cst_22 {dimension_numbers = #tpu.dot_dimension_numbers<[1], [0], [0], [1], [0, 0, 1, 1], [], []>} : vector<32x896xbf16>, vector<896x128xbf16>, vector<32x128xf32> -> vector<32x128xf32>
    %c0_23 = arith.constant 0 : index
    %c0_24 = arith.constant 0 : index
    %21 = vector.load %arg3[%c0_23, %c0_24] : memref<1x128xf32, #tpu.memory_space<vmem>>, vector<1x128xf32>
    %22 = vector.broadcast %21 : vector<1x128xf32> to vector<32x128xf32>
    %23 = arith.addf %20, %22 : vector<32x128xf32>
    %cst_25 = arith.constant dense<0.000000e+00> : vector<128xf32>
    %24 = vector.multi_reduction <add>, %23, %cst_25 [0] : vector<32x128xf32> to vector<128xf32>
    %25 = vector.shape_cast %24 : vector<128xf32> to vector<1x128xf32>
    %cst_26 = arith.constant 3.125000e-02 : f32
    %26 = vector.broadcast %cst_26 : f32 to vector<1x128xf32>
    %27 = arith.mulf %25, %26 : vector<1x128xf32>
    %28 = arith.mulf %23, %23 : vector<32x128xf32>
    %cst_27 = arith.constant dense<0.000000e+00> : vector<128xf32>
    %29 = vector.multi_reduction <add>, %28, %cst_27 [0] : vector<32x128xf32> to vector<128xf32>
    %30 = vector.shape_cast %29 : vector<128xf32> to vector<1x128xf32>
    %cst_28 = arith.constant 3.125000e-02 : f32
    %31 = vector.broadcast %cst_28 : f32 to vector<1x128xf32>
    %32 = arith.mulf %30, %31 : vector<1x128xf32>
    %33 = arith.mulf %27, %27 : vector<1x128xf32>
    %34 = arith.subf %32, %33 : vector<1x128xf32>
    %35 = vector.broadcast %27 : vector<1x128xf32> to vector<32x128xf32>
    %36 = arith.subf %23, %35 : vector<32x128xf32>
    %cst_29 = arith.constant 9.99999974E-6 : f32
    %37 = vector.broadcast %cst_29 : f32 to vector<1x128xf32>
    %38 = arith.addf %34, %37 : vector<1x128xf32>
    %39 = math.rsqrt %38 : vector<1x128xf32>
    %40 = vector.broadcast %39 : vector<1x128xf32> to vector<32x128xf32>
    %41 = arith.mulf %36, %40 : vector<32x128xf32>
    %c0_30 = arith.constant 0 : index
    %c0_31 = arith.constant 0 : index
    %42 = vector.load %arg4[%c0_30, %c0_31] : memref<1x128xf32, #tpu.memory_space<vmem>>, vector<1x128xf32>
    %43 = vector.broadcast %42 : vector<1x128xf32> to vector<32x128xf32>
    %44 = arith.mulf %41, %43 : vector<32x128xf32>
    %c0_32 = arith.constant 0 : index
    %c0_33 = arith.constant 0 : index
    %45 = vector.load %arg5[%c0_32, %c0_33] : memref<1x128xf32, #tpu.memory_space<vmem>>, vector<1x128xf32>
    %46 = vector.broadcast %45 : vector<1x128xf32> to vector<32x128xf32>
    %47 = arith.addf %44, %46 : vector<32x128xf32>
    %cst_34 = arith.constant 0.000000e+00 : f32
    %48 = vector.broadcast %cst_34 : f32 to vector<32x128xf32>
    %49 = arith.maximumf %47, %48 : vector<32x128xf32>
    %50 = vector.shape_cast %49 : vector<32x128xf32> to vector<2x16x128xf32>
    %cst_35 = arith.constant 0.000000e+00 : f32
    %51 = vector.broadcast %cst_35 : f32 to vector<2x16x896xf32>
    %c0_36 = arith.constant 0 : index
    %c0_37 = arith.constant 0 : index
    %c0_38 = arith.constant 0 : index
    %52 = vector.load %arg17[%c0_36, %c0_37, %c0_38] : memref<2x16x896xf32, #tpu.memory_space<vmem>>, vector<2x16x896xf32>
    tpu.vector_store %arg17[%c0_36, %c0_37, %c0_38], %51 {strides = array<i32>} : memref<2x16x896xf32, #tpu.memory_space<vmem>>, vector<2x16x896xf32>,
    %53 = vector.extract_strided_slice %50 {offsets = [0, 0, 0], sizes = [2, 13, 128], strides = [1, 1, 1]} : vector<2x16x128xf32> to vector<2x13x128xf32>
    %c0_39 = arith.constant 0 : index
    %c3_40 = arith.constant 3 : index
    %c0_41 = arith.constant 0 : index
    %54 = vector.load %arg17[%c0_39, %c3_40, %c0_41] : memref<2x16x896xf32, #tpu.memory_space<vmem>>, vector<2x13x128xf32>
    tpu.vector_store %arg17[%c0_39, %c3_40, %c0_41], %53 {strides = array<i32>} : memref<2x16x896xf32, #tpu.memory_space<vmem>>, vector<2x13x128xf32>,
    %55 = vector.extract_strided_slice %50 {offsets = [0, 0, 0], sizes = [2, 14, 128], strides = [1, 1, 1]} : vector<2x16x128xf32> to vector<2x14x128xf32>
    %c0_42 = arith.constant 0 : index
    %c2_43 = arith.constant 2 : index
    %c128_44 = arith.constant 128 : index
    %56 = vector.load %arg17[%c0_42, %c2_43, %c128_44] : memref<2x16x896xf32, #tpu.memory_space<vmem>>, vector<2x14x128xf32>
    tpu.vector_store %arg17[%c0_42, %c2_43, %c128_44], %55 {strides = array<i32>} : memref<2x16x896xf32, #tpu.memory_space<vmem>>, vector<2x14x128xf32>,
    %57 = vector.extract_strided_slice %50 {offsets = [0, 0, 0], sizes = [2, 15, 128], strides = [1, 1, 1]} : vector<2x16x128xf32> to vector<2x15x128xf32>
    %c0_45 = arith.constant 0 : index
    %c1_46 = arith.constant 1 : index
    %c256_47 = arith.constant 256 : index
    %58 = vector.load %arg17[%c0_45, %c1_46, %c256_47] : memref<2x16x896xf32, #tpu.memory_space<vmem>>, vector<2x15x128xf32>
    tpu.vector_store %arg17[%c0_45, %c1_46, %c256_47], %57 {strides = array<i32>} : memref<2x16x896xf32, #tpu.memory_space<vmem>>, vector<2x15x128xf32>,
    %c0_48 = arith.constant 0 : index
    %c0_49 = arith.constant 0 : index
    %c384_50 = arith.constant 384 : index
    %59 = vector.load %arg17[%c0_48, %c0_49, %c384_50] : memref<2x16x896xf32, #tpu.memory_space<vmem>>, vector<2x16x128xf32>
    tpu.vector_store %arg17[%c0_48, %c0_49, %c384_50], %50 {strides = array<i32>} : memref<2x16x896xf32, #tpu.memory_space<vmem>>, vector<2x16x128xf32>,
    %60 = vector.extract_strided_slice %50 {offsets = [0, 1, 0], sizes = [2, 15, 128], strides = [1, 1, 1]} : vector<2x16x128xf32> to vector<2x15x128xf32>
    %c0_51 = arith.constant 0 : index
    %c0_52 = arith.constant 0 : index
    %c512_53 = arith.constant 512 : index
    %61 = vector.load %arg17[%c0_51, %c0_52, %c512_53] : memref<2x16x896xf32, #tpu.memory_space<vmem>>, vector<2x15x128xf32>
    tpu.vector_store %arg17[%c0_51, %c0_52, %c512_53], %60 {strides = array<i32>} : memref<2x16x896xf32, #tpu.memory_space<vmem>>, vector<2x15x128xf32>,
    %62 = vector.extract_strided_slice %50 {offsets = [0, 2, 0], sizes = [2, 14, 128], strides = [1, 1, 1]} : vector<2x16x128xf32> to vector<2x14x128xf32>
    %c0_54 = arith.constant 0 : index
    %c0_55 = arith.constant 0 : index
    %c640_56 = arith.constant 640 : index
    %63 = vector.load %arg17[%c0_54, %c0_55, %c640_56] : memref<2x16x896xf32, #tpu.memory_space<vmem>>, vector<2x14x128xf32>
    tpu.vector_store %arg17[%c0_54, %c0_55, %c640_56], %62 {strides = array<i32>} : memref<2x16x896xf32, #tpu.memory_space<vmem>>, vector<2x14x128xf32>,
    %64 = vector.extract_strided_slice %50 {offsets = [0, 3, 0], sizes = [2, 13, 128], strides = [1, 1, 1]} : vector<2x16x128xf32> to vector<2x13x128xf32>
    %c0_57 = arith.constant 0 : index
    %c0_58 = arith.constant 0 : index
    %c768_59 = arith.constant 768 : index
    %65 = vector.load %arg17[%c0_57, %c0_58, %c768_59] : memref<2x16x896xf32, #tpu.memory_space<vmem>>, vector<2x13x128xf32>
    tpu.vector_store %arg17[%c0_57, %c0_58, %c768_59], %64 {strides = array<i32>} : memref<2x16x896xf32, #tpu.memory_space<vmem>>, vector<2x13x128xf32>,
    %c0_60 = arith.constant 0 : index
    %c0_61 = arith.constant 0 : index
    %c0_62 = arith.constant 0 : index
    %66 = vector.load %arg17[%c0_60, %c0_61, %c0_62] : memref<2x16x896xf32, #tpu.memory_space<vmem>>, vector<2x16x896xf32>
    %67 = vector.shape_cast %66 : vector<2x16x896xf32> to vector<32x896xf32>
    %68 = arith.truncf %67 : vector<32x896xf32> to vector<32x896xbf16>
    %c0_63 = arith.constant 0 : index
    %c0_64 = arith.constant 0 : index
    %69 = vector.load %arg6[%c0_63, %c0_64] : memref<896x128xbf16, #tpu.memory_space<vmem>>, vector<896x128xbf16>
    %cst_65 = arith.constant dense<0.000000e+00> : vector<32x128xf32>
    %70 = tpu.matmul %68, %69, %cst_65 {dimension_numbers = #tpu.dot_dimension_numbers<[1], [0], [0], [1], [0, 0, 1, 1], [], []>} : vector<32x896xbf16>, vector<896x128xbf16>, vector<32x128xf32> -> vector<32x128xf32>
    %c0_66 = arith.constant 0 : index
    %c0_67 = arith.constant 0 : index
    %71 = vector.load %arg7[%c0_66, %c0_67] : memref<1x128xf32, #tpu.memory_space<vmem>>, vector<1x128xf32>
    %72 = vector.broadcast %71 : vector<1x128xf32> to vector<32x128xf32>
    %73 = arith.addf %70, %72 : vector<32x128xf32>
    %cst_68 = arith.constant dense<0.000000e+00> : vector<128xf32>
    %74 = vector.multi_reduction <add>, %73, %cst_68 [0] : vector<32x128xf32> to vector<128xf32>
    %75 = vector.shape_cast %74 : vector<128xf32> to vector<1x128xf32>
    %cst_69 = arith.constant 3.125000e-02 : f32
    %76 = vector.broadcast %cst_69 : f32 to vector<1x128xf32>
    %77 = arith.mulf %75, %76 : vector<1x128xf32>
    %78 = arith.mulf %73, %73 : vector<32x128xf32>
    %cst_70 = arith.constant dense<0.000000e+00> : vector<128xf32>
    %79 = vector.multi_reduction <add>, %78, %cst_70 [0] : vector<32x128xf32> to vector<128xf32>
    %80 = vector.shape_cast %79 : vector<128xf32> to vector<1x128xf32>
    %cst_71 = arith.constant 3.125000e-02 : f32
    %81 = vector.broadcast %cst_71 : f32 to vector<1x128xf32>
    %82 = arith.mulf %80, %81 : vector<1x128xf32>
    %83 = arith.mulf %77, %77 : vector<1x128xf32>
    %84 = arith.subf %82, %83 : vector<1x128xf32>
    %85 = vector.broadcast %77 : vector<1x128xf32> to vector<32x128xf32>
    %86 = arith.subf %73, %85 : vector<32x128xf32>
    %cst_72 = arith.constant 9.99999974E-6 : f32
    %87 = vector.broadcast %cst_72 : f32 to vector<1x128xf32>
    %88 = arith.addf %84, %87 : vector<1x128xf32>
    %89 = math.rsqrt %88 : vector<1x128xf32>
    %90 = vector.broadcast %89 : vector<1x128xf32> to vector<32x128xf32>
    %91 = arith.mulf %86, %90 : vector<32x128xf32>
    %c0_73 = arith.constant 0 : index
    %c0_74 = arith.constant 0 : index
    %92 = vector.load %arg8[%c0_73, %c0_74] : memref<1x128xf32, #tpu.memory_space<vmem>>, vector<1x128xf32>
    %93 = vector.broadcast %92 : vector<1x128xf32> to vector<32x128xf32>
    %94 = arith.mulf %91, %93 : vector<32x128xf32>
    %c0_75 = arith.constant 0 : index
    %c0_76 = arith.constant 0 : index
    %95 = vector.load %arg9[%c0_75, %c0_76] : memref<1x128xf32, #tpu.memory_space<vmem>>, vector<1x128xf32>
    %96 = vector.broadcast %95 : vector<1x128xf32> to vector<32x128xf32>
    %97 = arith.addf %94, %96 : vector<32x128xf32>
    %cst_77 = arith.constant 0.000000e+00 : f32
    %98 = vector.broadcast %cst_77 : f32 to vector<32x128xf32>
    %99 = arith.maximumf %97, %98 : vector<32x128xf32>
    %100 = vector.shape_cast %99 : vector<32x128xf32> to vector<2x16x128xf32>
    %cst_78 = arith.constant 0.000000e+00 : f32
    %101 = vector.broadcast %cst_78 : f32 to vector<2x16x896xf32>
    %c0_79 = arith.constant 0 : index
    %c0_80 = arith.constant 0 : index
    %c0_81 = arith.constant 0 : index
    %102 = vector.load %arg17[%c0_79, %c0_80, %c0_81] : memref<2x16x896xf32, #tpu.memory_space<vmem>>, vector<2x16x896xf32>
    tpu.vector_store %arg17[%c0_79, %c0_80, %c0_81], %101 {strides = array<i32>} : memref<2x16x896xf32, #tpu.memory_space<vmem>>, vector<2x16x896xf32>,
    %c0_82 = arith.constant 0 : index
    %c0_83 = arith.constant 0 : index
    %c0_84 = arith.constant 0 : index
    %103 = vector.load %arg17[%c0_82, %c0_83, %c0_84] : memref<2x16x896xf32, #tpu.memory_space<vmem>>, vector<2x16x128xf32>
    tpu.vector_store %arg17[%c0_82, %c0_83, %c0_84], %100 {strides = array<i32>} : memref<2x16x896xf32, #tpu.memory_space<vmem>>, vector<2x16x128xf32>,
    %104 = vector.extract_strided_slice %100 {offsets = [0, 1, 0], sizes = [2, 15, 128], strides = [1, 1, 1]} : vector<2x16x128xf32> to vector<2x15x128xf32>
    %c0_85 = arith.constant 0 : index
    %c0_86 = arith.constant 0 : index
    %c128_87 = arith.constant 128 : index
    %105 = vector.load %arg17[%c0_85, %c0_86, %c128_87] : memref<2x16x896xf32, #tpu.memory_space<vmem>>, vector<2x15x128xf32>
    tpu.vector_store %arg17[%c0_85, %c0_86, %c128_87], %104 {strides = array<i32>} : memref<2x16x896xf32, #tpu.memory_space<vmem>>, vector<2x15x128xf32>,
    %c0_88 = arith.constant 0 : index
    %c0_89 = arith.constant 0 : index
    %c0_90 = arith.constant 0 : index
    %106 = vector.load %arg17[%c0_88, %c0_89, %c0_90] : memref<2x16x896xf32, #tpu.memory_space<vmem>>, vector<2x16x256xf32>
    %107 = vector.shape_cast %106 : vector<2x16x256xf32> to vector<32x256xf32>
    %108 = arith.truncf %107 : vector<32x256xf32> to vector<32x256xbf16>
    %c0_91 = arith.constant 0 : index
    %c0_92 = arith.constant 0 : index
    %109 = vector.load %arg10[%c0_91, %c0_92] : memref<256x128xbf16, #tpu.memory_space<vmem>>, vector<256x128xbf16>
    %cst_93 = arith.constant dense<0.000000e+00> : vector<32x128xf32>
    %110 = tpu.matmul %108, %109, %cst_93 {dimension_numbers = #tpu.dot_dimension_numbers<[1], [0], [0], [1], [0, 0, 1, 1], [], []>} : vector<32x256xbf16>, vector<256x128xbf16>, vector<32x128xf32> -> vector<32x128xf32>
    %c0_94 = arith.constant 0 : index
    %c0_95 = arith.constant 0 : index
    %111 = vector.load %arg11[%c0_94, %c0_95] : memref<1x128xf32, #tpu.memory_space<vmem>>, vector<1x128xf32>
    %112 = vector.broadcast %111 : vector<1x128xf32> to vector<32x128xf32>
    %113 = arith.addf %110, %112 : vector<32x128xf32>
    %cst_96 = arith.constant dense<0.000000e+00> : vector<128xf32>
    %114 = vector.multi_reduction <add>, %113, %cst_96 [0] : vector<32x128xf32> to vector<128xf32>
    %115 = vector.shape_cast %114 : vector<128xf32> to vector<1x128xf32>
    %cst_97 = arith.constant 3.125000e-02 : f32
    %116 = vector.broadcast %cst_97 : f32 to vector<1x128xf32>
    %117 = arith.mulf %115, %116 : vector<1x128xf32>
    %118 = arith.mulf %113, %113 : vector<32x128xf32>
    %cst_98 = arith.constant dense<0.000000e+00> : vector<128xf32>
    %119 = vector.multi_reduction <add>, %118, %cst_98 [0] : vector<32x128xf32> to vector<128xf32>
    %120 = vector.shape_cast %119 : vector<128xf32> to vector<1x128xf32>
    %cst_99 = arith.constant 3.125000e-02 : f32
    %121 = vector.broadcast %cst_99 : f32 to vector<1x128xf32>
    %122 = arith.mulf %120, %121 : vector<1x128xf32>
    %123 = arith.mulf %117, %117 : vector<1x128xf32>
    %124 = arith.subf %122, %123 : vector<1x128xf32>
    %125 = vector.broadcast %117 : vector<1x128xf32> to vector<32x128xf32>
    %126 = arith.subf %113, %125 : vector<32x128xf32>
    %cst_100 = arith.constant 9.99999974E-6 : f32
    %127 = vector.broadcast %cst_100 : f32 to vector<1x128xf32>
    %128 = arith.addf %124, %127 : vector<1x128xf32>
    %129 = math.rsqrt %128 : vector<1x128xf32>
    %130 = vector.broadcast %129 : vector<1x128xf32> to vector<32x128xf32>
    %131 = arith.mulf %126, %130 : vector<32x128xf32>
    %c0_101 = arith.constant 0 : index
    %c0_102 = arith.constant 0 : index
    %132 = vector.load %arg12[%c0_101, %c0_102] : memref<1x128xf32, #tpu.memory_space<vmem>>, vector<1x128xf32>
    %133 = vector.broadcast %132 : vector<1x128xf32> to vector<32x128xf32>
    %134 = arith.mulf %131, %133 : vector<32x128xf32>
    %c0_103 = arith.constant 0 : index
    %c0_104 = arith.constant 0 : index
    %135 = vector.load %arg13[%c0_103, %c0_104] : memref<1x128xf32, #tpu.memory_space<vmem>>, vector<1x128xf32>
    %136 = vector.broadcast %135 : vector<1x128xf32> to vector<32x128xf32>
    %137 = arith.addf %134, %136 : vector<32x128xf32>
    %cst_105 = arith.constant 0.000000e+00 : f32
    %138 = vector.broadcast %cst_105 : f32 to vector<32x128xf32>
    %139 = arith.maximumf %137, %138 : vector<32x128xf32>
    %140 = vector.shape_cast %139 : vector<32x128xf32> to vector<2x16x128xf32>
    %cst_106 = arith.constant dense<0.000000e+00> : vector<2x128xf32>
    %141 = vector.multi_reduction <add>, %140, %cst_106 [1] : vector<2x16x128xf32> to vector<2x128xf32>
    %cst_107 = arith.constant 1.600000e+01 : f32
    %142 = vector.broadcast %cst_107 : f32 to vector<2x128xf32>
    %143 = arith.divf %141, %142 : vector<2x128xf32>
    %c0_108 = arith.constant 0 : index
    %c0_109 = arith.constant 0 : index
    %144 = vector.load %arg14[%c0_108, %c0_109] : memref<128x128xf32, #tpu.memory_space<vmem>>, vector<128x128xf32>
    %cst_110 = arith.constant dense<0.000000e+00> : vector<2x128xf32>
    %145 = tpu.matmul %143, %144, %cst_110 {dimension_numbers = #tpu.dot_dimension_numbers<[1], [0], [0], [1], [0, 0, 1, 1], [], []>} : vector<2x128xf32>, vector<128x128xf32>, vector<2x128xf32> -> vector<2x128xf32>
    %c0_111 = arith.constant 0 : index
    %c0_112 = arith.constant 0 : index
    %146 = vector.load %arg15[%c0_111, %c0_112] : memref<1x128xf32, #tpu.memory_space<vmem>>, vector<1x128xf32>
    %147 = vector.broadcast %146 : vector<1x128xf32> to vector<2x128xf32>
    %148 = arith.addf %145, %147 : vector<2x128xf32>
    %c0_113 = arith.constant 0 : index
    %c0_114 = arith.constant 0 : index
    %149 = vector.load %arg16[%c0_113, %c0_114] : memref<2x128xf32, #tpu.memory_space<vmem>>, vector<2x128xf32>
    tpu.vector_store %arg16[%c0_113, %c0_114], %148 {strides = array<i32>} : memref<2x128xf32, #tpu.memory_space<vmem>>, vector<2x128xf32>,
    return
  }
  func.func @transform_0(%arg0: i32) -> (i32, i32, i32) {
    %c0_i32 = arith.constant 0 : i32
    %c0_i32_0 = arith.constant 0 : i32
    %c0_i32_1 = arith.constant 0 : i32
    %c0_i32_2 = arith.constant 0 : i32
    return %c0_i32, %c0_i32_0, %c0_i32_1 : i32, i32, i32
  }
  func.func @transform_1(%arg0: i32) -> (i32, i32) {
    %c0_i32 = arith.constant 0 : i32
    %c0_i32_0 = arith.constant 0 : i32
    %c0_i32_1 = arith.constant 0 : i32
    return %c0_i32, %c0_i32_0 : i32, i32
  }
  func.func @transform_2(%arg0: i32) -> (i32, i32) {
    %c0_i32 = arith.constant 0 : i32
    %c0_i32_0 = arith.constant 0 : i32
    %c0_i32_1 = arith.constant 0 : i32
    return %c0_i32, %c0_i32_0 : i32, i32
  }
  func.func @transform_3(%arg0: i32) -> (i32, i32) {
    %c0_i32 = arith.constant 0 : i32
    %c0_i32_0 = arith.constant 0 : i32
    %c0_i32_1 = arith.constant 0 : i32
    return %c0_i32, %c0_i32_0 : i32, i32
  }
  func.func @transform_4(%arg0: i32) -> (i32, i32) {
    %c0_i32 = arith.constant 0 : i32
    %c0_i32_0 = arith.constant 0 : i32
    %c0_i32_1 = arith.constant 0 : i32
    return %c0_i32, %c0_i32_0 : i32, i32
  }
  func.func @transform_5(%arg0: i32) -> (i32, i32) {
    %c0_i32 = arith.constant 0 : i32
    %c0_i32_0 = arith.constant 0 : i32
    %c0_i32_1 = arith.constant 0 : i32
    return %c0_i32, %c0_i32_0 : i32, i32
  }
  func.func @transform_6(%arg0: i32) -> (i32, i32) {
    %c0_i32 = arith.constant 0 : i32
    %c0_i32_0 = arith.constant 0 : i32
    %c0_i32_1 = arith.constant 0 : i32
    return %c0_i32, %c0_i32_0 : i32, i32
  }
  func.func @transform_7(%arg0: i32) -> (i32, i32) {
    %c0_i32 = arith.constant 0 : i32
    %c0_i32_0 = arith.constant 0 : i32
    %c0_i32_1 = arith.constant 0 : i32
    return %c0_i32, %c0_i32_0 : i32, i32
  }
  func.func @transform_8(%arg0: i32) -> (i32, i32) {
    %c0_i32 = arith.constant 0 : i32
    %c0_i32_0 = arith.constant 0 : i32
    %c0_i32_1 = arith.constant 0 : i32
    return %c0_i32, %c0_i32_0 : i32, i32
  }
  func.func @transform_9(%arg0: i32) -> (i32, i32) {
    %c0_i32 = arith.constant 0 : i32
    %c0_i32_0 = arith.constant 0 : i32
    %c0_i32_1 = arith.constant 0 : i32
    return %c0_i32, %c0_i32_0 : i32, i32
  }
  func.func @transform_10(%arg0: i32) -> (i32, i32) {
    %c0_i32 = arith.constant 0 : i32
    %c0_i32_0 = arith.constant 0 : i32
    %c0_i32_1 = arith.constant 0 : i32
    return %c0_i32, %c0_i32_0 : i32, i32
  }
  func.func @transform_11(%arg0: i32) -> (i32, i32) {
    %c0_i32 = arith.constant 0 : i32
    %c0_i32_0 = arith.constant 0 : i32
    %c0_i32_1 = arith.constant 0 : i32
    return %c0_i32, %c0_i32_0 : i32, i32
  }
  func.func @transform_12(%arg0: i32) -> (i32, i32) {
    %c0_i32 = arith.constant 0 : i32
    %c0_i32_0 = arith.constant 0 : i32
    %c0_i32_1 = arith.constant 0 : i32
    return %c0_i32, %c0_i32_0 : i32, i32
  }
  func.func @transform_13(%arg0: i32) -> (i32, i32) {
    %c0_i32 = arith.constant 0 : i32
    %c0_i32_0 = arith.constant 0 : i32
    %c0_i32_1 = arith.constant 0 : i32
    return %c0_i32, %c0_i32_0 : i32, i32
  }
  func.func @transform_14(%arg0: i32) -> (i32, i32) {
    %c0_i32 = arith.constant 0 : i32
    %c0_i32_0 = arith.constant 0 : i32
    %c0_i32_1 = arith.constant 0 : i32
    return %c0_i32, %c0_i32_0 : i32, i32
  }
  func.func @transform_15(%arg0: i32) -> (i32, i32) {
    %c0_i32 = arith.constant 0 : i32
    %c0_i32_0 = arith.constant 0 : i32
    %c0_i32_1 = arith.constant 0 : i32
    return %c0_i32, %c0_i32_0 : i32, i32
  }
}

</mosaic_0001>

<llo_original>
// kernel: tpu_custom_call.1
$region0: #{tpu_custom_call.1}
  #allocation0 [shape = 'u32[]', space=smem, size = 0x4, offset = 0x4, fixed_abs, tag = 'smem constant byte address 0x4 - core index']
  #allocation1 [shape = 'u32[144,128]{1,0:T(1,128)}', space=vmem, size = 0x12000, scoped, tag = 'internal scratch']
  #allocation2 [shape = 'f32[2,16,896]{2,1,0:T(8,128)}', space=vmem, size = 0x1c000, scoped, tag = 'scratch operand']
  %s0 = inlined_call_operand.hbm [shape: f32[2,16,128], index: 0, kind: input, shape index: {}]
  %s1 = inlined_call_operand.hbm [shape: bf16[896,128], index: 1, kind: input, shape index: {}]
  %s2 = inlined_call_operand.vmem [shape: f32[1,128], index: 2, kind: input, shape index: {}]
  %s3 = inlined_call_operand.vmem [shape: f32[1,128], index: 3, kind: input, shape index: {}]
  %s4 = inlined_call_operand.vmem [shape: f32[1,128], index: 4, kind: input, shape index: {}]
  %s5 = inlined_call_operand.hbm [shape: bf16[896,128], index: 5, kind: input, shape index: {}]
  %s6 = inlined_call_operand.vmem [shape: f32[1,128], index: 6, kind: input, shape index: {}]
  %s7 = inlined_call_operand.vmem [shape: f32[1,128], index: 7, kind: input, shape index: {}]
  %s8 = inlined_call_operand.vmem [shape: f32[1,128], index: 8, kind: input, shape index: {}]
  %s9 = inlined_call_operand.hbm [shape: bf16[256,128], index: 9, kind: input, shape index: {}]
  %s10 = inlined_call_operand.vmem [shape: f32[1,128], index: 10, kind: input, shape index: {}]
  %s11 = inlined_call_operand.vmem [shape: f32[1,128], index: 11, kind: input, shape index: {}]
  %s12 = inlined_call_operand.vmem [shape: f32[1,128], index: 12, kind: input, shape index: {}]
  %s13 = inlined_call_operand.hbm [shape: f32[128,128], index: 13, kind: input, shape index: {}]
  %s14 = inlined_call_operand.vmem [shape: f32[1,128], index: 14, kind: input, shape index: {}]
  %s15 = inlined_call_operand.hbm [shape: f32[2,128], index: 15, kind: output, shape index: {}]
  %s16 = sld [smem:[#allocation0]]
  $region90: #{tpu_custom_call.1} parent=0
    _
  %s18 = ssub.s32 1, %s16
  %s19 = scalar_select 0, %s18, %s16
  $region1: #{tpu_custom_call.1} parent=0
    #allocation3 [shape = 'u8[16384]{0}', space=vmem, size = 0x4000, scoped, tag = 'input window, operand 0, single buffered']
    #allocation4 [shape = 's32[1]{0}', space=sflag, size = 0x4, scoped, tag = 'scoped memory for tpu_custom_call.1']
    #allocation5 [shape = 's32[1]{0}', space=sflag, size = 0x4, scoped, tag = 'scoped memory for tpu_custom_call.1']
    #allocation6 [shape = 'u8[229376]{0}', space=vmem, size = 0x38000, scoped, tag = 'input window, operand 1, single buffered']
    #allocation7 [shape = 's32[1]{0}', space=sflag, size = 0x4, scoped, tag = 'scoped memory for tpu_custom_call.1']
    #allocation8 [shape = 'u8[229376]{0}', space=vmem, size = 0x38000, scoped, tag = 'input window, operand 5, single buffered']
    #allocation9 [shape = 'u8[65536]{0}', space=vmem, size = 0x10000, scoped, tag = 'input window, operand 9, single buffered']
    #allocation10 [shape = 's32[1]{0}', space=sflag, size = 0x4, scoped, tag = 'scoped memory for tpu_custom_call.1']
    #allocation11 [shape = 'u8[65536]{0}', space=vmem, size = 0x10000, scoped, tag = 'input window, operand 13, single buffered']
    #allocation12 [shape = 'u8[1024]{0}', space=vmem, size = 0x400, scoped, tag = 'output window, operand 0, single buffered']
    %20 = vsyncpa [#allocation4], 0
    %21 = vsyncpa [#allocation7], 0
    %22 = vsyncpa [#allocation10], 0
    %23 = vsyncpa [#allocation5], 0
    // Predicated region
    $region2: #{tpu_custom_call.1} parent=1 // pred_check
      _
    $region3: #{tpu_custom_call.1} parent=1 // pred_check_branch
      %25 = sbr.rel (0) target = $region5
    $region4: #{tpu_custom_call.1} parent=1 // pred_region
      %s27 = ssub.s32 512, 512
      %28 = vsyncadd [#allocation4], %s27
      %s29 = sshll.u32 [#allocation3], 4
      %s30 = int_to_ptr.vmem [resolvable:$true] %s29
      %35 = dma.hbm_to_vmem [thread:$0]  %s0, 512, %s30, [#allocation4], 128, 128, 8
    $region5: #{tpu_custom_call.1} parent=1 // pred_fallthru
      _
    // Predicated region
    $region6: #{tpu_custom_call.1} parent=1 // pred_check
      _
    $region7: #{tpu_custom_call.1} parent=1 // pred_check_branch
      %37 = sbr.rel (0) target = $region9
    $region8: #{tpu_custom_call.1} parent=1 // pred_region
      %s39 = ssub.s32 7168, 7168
      %40 = vsyncadd [#allocation7], %s39
      %s41 = sshll.u32 [#allocation6], 4
      %s42 = int_to_ptr.vmem [resolvable:$true] %s41
      %47 = dma.hbm_to_vmem [thread:$0]  %s1, 7168, %s42, [#allocation7], 64, 64, 4
    $region9: #{tpu_custom_call.1} parent=1 // pred_fallthru
      _
    // Predicated region
    $region10: #{tpu_custom_call.1} parent=1 // pred_check
      _
    $region11: #{tpu_custom_call.1} parent=1 // pred_check_branch
      %49 = sbr.rel (0) target = $region13
    $region12: #{tpu_custom_call.1} parent=1 // pred_region
      _
    $region13: #{tpu_custom_call.1} parent=1 // pred_fallthru
      _
    // Predicated region
    $region14: #{tpu_custom_call.1} parent=1 // pred_check
      _
    $region15: #{tpu_custom_call.1} parent=1 // pred_check_branch
      %51 = sbr.rel (0) target = $region17
    $region16: #{tpu_custom_call.1} parent=1 // pred_region
      _
    $region17: #{tpu_custom_call.1} parent=1 // pred_fallthru
      _
    // Predicated region
    $region18: #{tpu_custom_call.1} parent=1 // pred_check
      _
    $region19: #{tpu_custom_call.1} parent=1 // pred_check_branch
      %53 = sbr.rel (0) target = $region21
    $region20: #{tpu_custom_call.1} parent=1 // pred_region
      _
    $region21: #{tpu_custom_call.1} parent=1 // pred_fallthru
      _
    // Predicated region
    $region22: #{tpu_custom_call.1} parent=1 // pred_check
      _
    $region23: #{tpu_custom_call.1} parent=1 // pred_check_branch
      %55 = sbr.rel (0) target = $region25
    $region24: #{tpu_custom_call.1} parent=1 // pred_region
      %s57 = ssub.s32 7168, 7168
      %58 = vsyncadd [#allocation7], %s57
      %s59 = sshll.u32 [#allocation8], 4
      %s60 = int_to_ptr.vmem [resolvable:$true] %s59
      %65 = dma.hbm_to_vmem [thread:$0]  %s5, 7168, %s60, [#allocation7], 64, 64, 4
    $region25: #{tpu_custom_call.1} parent=1 // pred_fallthru
      _
    // Predicated region
    $region26: #{tpu_custom_call.1} parent=1 // pred_check
      _
    $region27: #{tpu_custom_call.1} parent=1 // pred_check_branch
      %67 = sbr.rel (0) target = $region29
    $region28: #{tpu_custom_call.1} parent=1 // pred_region
      _
    $region29: #{tpu_custom_call.1} parent=1 // pred_fallthru
      _
    // Predicated region
    $region30: #{tpu_custom_call.1} parent=1 // pred_check
      _
    $region31: #{tpu_custom_call.1} parent=1 // pred_check_branch
      %69 = sbr.rel (0) target = $region33
    $region32: #{tpu_custom_call.1} parent=1 // pred_region
      _
    $region33: #{tpu_custom_call.1} parent=1 // pred_fallthru
      _
    // Predicated region
    $region34: #{tpu_custom_call.1} parent=1 // pred_check
      _
    $region35: #{tpu_custom_call.1} parent=1 // pred_check_branch
      %71 = sbr.rel (0) target = $region37
    $region36: #{tpu_custom_call.1} parent=1 // pred_region
      _
    $region37: #{tpu_custom_call.1} parent=1 // pred_fallthru
      _
    // Predicated region
    $region38: #{tpu_custom_call.1} parent=1 // pred_check
      _
    $region39: #{tpu_custom_call.1} parent=1 // pred_check_branch
      %73 = sbr.rel (0) target = $region41
    $region40: #{tpu_custom_call.1} parent=1 // pred_region
      %s75 = ssub.s32 2048, 2048
      %76 = vsyncadd [#allocation10], %s75
      %s77 = sshll.u32 [#allocation9], 4
      %s78 = int_to_ptr.vmem [resolvable:$true] %s77
      %83 = dma.hbm_to_vmem [thread:$0]  %s9, 2048, %s78, [#allocation10], 64, 64, 4
    $region41: #{tpu_custom_call.1} parent=1 // pred_fallthru
      _
    // Predicated region
    $region42: #{tpu_custom_call.1} parent=1 // pred_check
      _
    $region43: #{tpu_custom_call.1} parent=1 // pred_check_branch
      %85 = sbr.rel (0) target = $region45
    $region44: #{tpu_custom_call.1} parent=1 // pred_region
      _
    $region45: #{tpu_custom_call.1} parent=1 // pred_fallthru
      _
    // Predicated region
    $region46: #{tpu_custom_call.1} parent=1 // pred_check
      _
    $region47: #{tpu_custom_call.1} parent=1 // pred_check_branch
      %87 = sbr.rel (0) target = $region49
    $region48: #{tpu_custom_call.1} parent=1 // pred_region
      _
    $region49: #{tpu_custom_call.1} parent=1 // pred_fallthru
      _
    // Predicated region
    $region50: #{tpu_custom_call.1} parent=1 // pred_check
      _
    $region51: #{tpu_custom_call.1} parent=1 // pred_check_branch
      %89 = sbr.rel (0) target = $region53
    $region52: #{tpu_custom_call.1} parent=1 // pred_region
      _
    $region53: #{tpu_custom_call.1} parent=1 // pred_fallthru
      _
    // Predicated region
    $region54: #{tpu_custom_call.1} parent=1 // pred_check
      _
    $region55: #{tpu_custom_call.1} parent=1 // pred_check_branch
      %91 = sbr.rel (0) target = $region57
    $region56: #{tpu_custom_call.1} parent=1 // pred_region
      %s93 = ssub.s32 2048, 2048
      %94 = vsyncadd [#allocation10], %s93
      %s95 = sshll.u32 [#allocation11], 4
      %s96 = int_to_ptr.vmem [resolvable:$true] %s95
      %101 = dma.hbm_to_vmem [thread:$0]  %s13, 2048, %s96, [#allocation10], 128, 128, 8
    $region57: #{tpu_custom_call.1} parent=1 // pred_fallthru
      _
    // Predicated region
    $region58: #{tpu_custom_call.1} parent=1 // pred_check
      _
    $region59: #{tpu_custom_call.1} parent=1 // pred_check_branch
      %103 = sbr.rel (0) target = $region61
    $region60: #{tpu_custom_call.1} parent=1 // pred_region
      _
    $region61: #{tpu_custom_call.1} parent=1 // pred_fallthru
      _
    // Predicated region
    $region62: #{tpu_custom_call.1} parent=1 // pred_check
      _
    $region63: #{tpu_custom_call.1} parent=1 // pred_check_branch
      %105 = sbr.rel (0) target = $region65
    $region64: #{tpu_custom_call.1} parent=1 // pred_region
      %106 = dma.done [#allocation4], 512
    $region65: #{tpu_custom_call.1} parent=1 // pred_fallthru
      _
    // Predicated region
    $region66: #{tpu_custom_call.1} parent=1 // pred_check
      _
    $region67: #{tpu_custom_call.1} parent=1 // pred_check_branch
      %108 = sbr.rel (0) target = $region69
    $region68: #{tpu_custom_call.1} parent=1 // pred_region
      %109 = dma.done [#allocation7], 7168
    $region69: #{tpu_custom_call.1} parent=1 // pred_fallthru
      _
    // Predicated region
    $region70: #{tpu_custom_call.1} parent=1 // pred_check
      _
    $region71: #{tpu_custom_call.1} parent=1 // pred_check_branch
      %111 = sbr.rel (0) target = $region73
    $region72: #{tpu_custom_call.1} parent=1 // pred_region
      %112 = dma.done [#allocation7], 7168
    $region73: #{tpu_custom_call.1} parent=1 // pred_fallthru
      _
    // Predicated region
    $region74: #{tpu_custom_call.1} parent=1 // pred_check
      _
    $region75: #{tpu_custom_call.1} parent=1 // pred_check_branch
      %114 = sbr.rel (0) target = $region77
    $region76: #{tpu_custom_call.1} parent=1 // pred_region
      %115 = dma.done [#allocation10], 2048
    $region77: #{tpu_custom_call.1} parent=1 // pred_fallthru
      _
    // Predicated region
    $region78: #{tpu_custom_call.1} parent=1 // pred_check
      _
    $region79: #{tpu_custom_call.1} parent=1 // pred_check_branch
      %117 = sbr.rel (0) target = $region81
    $region80: #{tpu_custom_call.1} parent=1 // pred_region
      %118 = dma.done [#allocation10], 2048
    $region81: #{tpu_custom_call.1} parent=1 // pred_fallthru
      _
    %v120 = vld [vmem:[#allocation3] sm:$0xff]
    %v121 = vld [vmem:[#allocation3 + $0x8] sm:$0xff]
    %v122 = vld [vmem:[#allocation3 + $0x10] sm:$0xff]
    %v123 = vld [vmem:[#allocation3 + $0x18] sm:$0xff]
    %124 = vst [vmem:[#allocation2] sm:$0xff] 0.0
    %125 = vst [vmem:[#allocation2 + $0x8] sm:$0xff] 0.0
    %126 = vst [vmem:[#allocation2 + $0x10] sm:$0xff] 0.0
    %127 = vst [vmem:[#allocation2 + $0x18] sm:$0xff] 0.0
    %128 = vst [vmem:[#allocation2 + $0x20] sm:$0xff] 0.0
    %129 = vst [vmem:[#allocation2 + $0x28] sm:$0xff] 0.0
    %130 = vst [vmem:[#allocation2 + $0x30] sm:$0xff] 0.0
    %131 = vst [vmem:[#allocation2 + $0x38] sm:$0xff] 0.0
    %132 = vst [vmem:[#allocation2 + $0x40] sm:$0xff] 0.0
    %133 = vst [vmem:[#allocation2 + $0x48] sm:$0xff] 0.0
    %134 = vst [vmem:[#allocation2 + $0x50] sm:$0xff] 0.0
    %135 = vst [vmem:[#allocation2 + $0x58] sm:$0xff] 0.0
    %136 = vst [vmem:[#allocation2 + $0x60] sm:$0xff] 0.0
    %137 = vst [vmem:[#allocation2 + $0x68] sm:$0xff] 0.0
    %138 = vst [vmem:[#allocation2 + $0x70] sm:$0xff] 0.0
    %139 = vst [vmem:[#allocation2 + $0x78] sm:$0xff] 0.0
    %140 = vst [vmem:[#allocation2 + $0x80] sm:$0xff] 0.0
    %141 = vst [vmem:[#allocation2 + $0x88] sm:$0xff] 0.0
    %142 = vst [vmem:[#allocation2 + $0x90] sm:$0xff] 0.0
    %143 = vst [vmem:[#allocation2 + $0x98] sm:$0xff] 0.0
    %144 = vst [vmem:[#allocation2 + $0xa0] sm:$0xff] 0.0
    %145 = vst [vmem:[#allocation2 + $0xa8] sm:$0xff] 0.0
    %146 = vst [vmem:[#allocation2 + $0xb0] sm:$0xff] 0.0
    %147 = vst [vmem:[#allocation2 + $0xb8] sm:$0xff] 0.0
    %148 = vst [vmem:[#allocation2 + $0xc0] sm:$0xff] 0.0
    %149 = vst [vmem:[#allocation2 + $0xc8] sm:$0xff] 0.0
    %150 = vst [vmem:[#allocation2 + $0xd0] sm:$0xff] 0.0
    %151 = vst [vmem:[#allocation2 + $0xd8] sm:$0xff] 0.0
    %vm156 = vcmask 1042432
    %v157 = vrot.slane %v120, 5
    %v158 = vrot.slane %v121, 5
    %v159 = vsel %vm156, %v157, %v158
    %v160 = vrot.slane %v122, 5
    %v161 = vrot.slane %v123, 5
    %v162 = vsel %vm156, %v160, %v161
    %167 = vst [vmem:[#allocation2] sm:$0xf8] %v157
    %168 = vst [vmem:[#allocation2 + $0x38] sm:$0xff] %v159
    %169 = vst [vmem:[#allocation2 + $0x70] sm:$0xf8] %v160
    %170 = vst [vmem:[#allocation2 + $0xa8] sm:$0xff] %v162
    %vm171 = vcmask 1041408
    %v172 = vrot.slane %v120, 6
    %v173 = vrot.slane %v121, 6
    %v174 = vsel %vm171, %v172, %v173
    %v175 = vrot.slane %v122, 6
    %v176 = vrot.slane %v123, 6
    %v177 = vsel %vm171, %v175, %v176
    %182 = vst [vmem:[#allocation2 + $0x8] sm:$0xfc] %v172
    %183 = vst [vmem:[#allocation2 + $0x40] sm:$0xff] %v174
    %184 = vst [vmem:[#allocation2 + $0x78] sm:$0xfc] %v175
    %185 = vst [vmem:[#allocation2 + $0xb0] sm:$0xff] %v177
    %vm186 = vcmask 1040384
    %v187 = vrot.slane %v120, 7
    %v188 = vrot.slane %v121, 7
    %v189 = vsel %vm186, %v187, %v188
    %v190 = vrot.slane %v122, 7
    %v191 = vrot.slane %v123, 7
    %v192 = vsel %vm186, %v190, %v191
    %197 = vst [vmem:[#allocation2 + $0x10] sm:$0xfe] %v187
    %198 = vst [vmem:[#allocation2 + $0x48] sm:$0xff] %v189
    %199 = vst [vmem:[#allocation2 + $0x80] sm:$0xfe] %v190
    %200 = vst [vmem:[#allocation2 + $0xb8] sm:$0xff] %v192
    %201 = vst [vmem:[#allocation2 + $0x18] sm:$0xff] %v120
    %202 = vst [vmem:[#allocation2 + $0x50] sm:$0xff] %v121
    %203 = vst [vmem:[#allocation2 + $0x88] sm:$0xff] %v122
    %204 = vst [vmem:[#allocation2 + $0xc0] sm:$0xff] %v123
    %vm205 = vcmask 1046528
    %v206 = vrot.slane %v120, 1
    %v207 = vrot.slane %v121, 1
    %v208 = vsel %vm205, %v206, %v207
    %v209 = vrot.slane %v122, 1
    %v210 = vrot.slane %v123, 1
    %v211 = vsel %vm205, %v209, %v210
    %216 = vst [vmem:[#allocation2 + $0x20] sm:$0xff] %v208
    %217 = vst [vmem:[#allocation2 + $0x58] sm:$0x7f] %v207
    %218 = vst [vmem:[#allocation2 + $0x90] sm:$0xff] %v211
    %219 = vst [vmem:[#allocation2 + $0xc8] sm:$0x7f] %v210
    %vm220 = vcmask 1045504
    %v221 = vrot.slane %v120, 2
    %v222 = vrot.slane %v121, 2
    %v223 = vsel %vm220, %v221, %v222
    %v224 = vrot.slane %v122, 2
    %v225 = vrot.slane %v123, 2
    %v226 = vsel %vm220, %v224, %v225
    %231 = vst [vmem:[#allocation2 + $0x28] sm:$0xff] %v223
    %232 = vst [vmem:[#allocation2 + $0x60] sm:$0x3f] %v222
    %233 = vst [vmem:[#allocation2 + $0x98] sm:$0xff] %v226
    %234 = vst [vmem:[#allocation2 + $0xd0] sm:$0x3f] %v225
    %vm235 = vcmask 1044480
    %v236 = vrot.slane %v120, 3
    %v237 = vrot.slane %v121, 3
    %v238 = vsel %vm235, %v236, %v237
    %v239 = vrot.slane %v122, 3
    %v240 = vrot.slane %v123, 3
    %v241 = vsel %vm235, %v239, %v240
    %246 = vst [vmem:[#allocation2 + $0x30] sm:$0xff] %v238
    %247 = vst [vmem:[#allocation2 + $0x68] sm:$0x1f] %v237
    %248 = vst [vmem:[#allocation2 + $0xa0] sm:$0xff] %v241
    %249 = vst [vmem:[#allocation2 + $0xd8] sm:$0x1f] %v240
    %v250 = vld [vmem:[#allocation2] sm:$0xff]
    %v251 = vld [vmem:[#allocation2 + $0x8] sm:$0xff]
    %v252 = vld [vmem:[#allocation2 + $0x10] sm:$0xff]
    %v253 = vld [vmem:[#allocation2 + $0x18] sm:$0xff]
    %v254 = vld [vmem:[#allocation2 + $0x20] sm:$0xff]
    %v255 = vld [vmem:[#allocation2 + $0x28] sm:$0xff]
    %v256 = vld [vmem:[#allocation2 + $0x30] sm:$0xff]
    %v257 = vld [vmem:[#allocation2 + $0x38] sm:$0xff]
    %v258 = vld [vmem:[#allocation2 + $0x40] sm:$0xff]
    %v259 = vld [vmem:[#allocation2 + $0x48] sm:$0xff]
    %v260 = vld [vmem:[#allocation2 + $0x50] sm:$0xff]
    %v261 = vld [vmem:[#allocation2 + $0x58] sm:$0xff]
    %v262 = vld [vmem:[#allocation2 + $0x60] sm:$0xff]
    %v263 = vld [vmem:[#allocation2 + $0x68] sm:$0xff]
    %v264 = vld [vmem:[#allocation2 + $0x70] sm:$0xff]
    %v265 = vld [vmem:[#allocation2 + $0x78] sm:$0xff]
    %v266 = vld [vmem:[#allocation2 + $0x80] sm:$0xff]
    %v267 = vld [vmem:[#allocation2 + $0x88] sm:$0xff]
    %v268 = vld [vmem:[#allocation2 + $0x90] sm:$0xff]
    %v269 = vld [vmem:[#allocation2 + $0x98] sm:$0xff]
    %v270 = vld [vmem:[#allocation2 + $0xa0] sm:$0xff]
    %v271 = vld [vmem:[#allocation2 + $0xa8] sm:$0xff]
    %v272 = vld [vmem:[#allocation2 + $0xb0] sm:$0xff]
    %v273 = vld [vmem:[#allocation2 + $0xb8] sm:$0xff]
    %v274 = vld [vmem:[#allocation2 + $0xc0] sm:$0xff]
    %v275 = vld [vmem:[#allocation2 + $0xc8] sm:$0xff]
    %v276 = vld [vmem:[#allocation2 + $0xd0] sm:$0xff]
    %v277 = vld [vmem:[#allocation2 + $0xd8] sm:$0xff]
    %v278 = vpack.c.bf16 %v257, %v250
    %v279 = vpack.c.bf16 %v258, %v251
    %v280 = vpack.c.bf16 %v259, %v252
    %v281 = vpack.c.bf16 %v260, %v253
    %v282 = vpack.c.bf16 %v261, %v254
    %v283 = vpack.c.bf16 %v262, %v255
    %v284 = vpack.c.bf16 %v263, %v256
    %v285 = vpack.c.bf16 %v271, %v264
    %v286 = vpack.c.bf16 %v272, %v265
    %v287 = vpack.c.bf16 %v273, %v266
    %v288 = vpack.c.bf16 %v274, %v267
    %v289 = vpack.c.bf16 %v275, %v268
    %v290 = vpack.c.bf16 %v276, %v269
    %v291 = vpack.c.bf16 %v277, %v270
    %v292 = vld [vmem:[#allocation6] sm:$0xf]
    %v293 = vld [vmem:[#allocation6 + $0x4] sm:$0xf]
    %v294 = vld [vmem:[#allocation6 + $0x8] sm:$0xf]
    %v295 = vld [vmem:[#allocation6 + $0xc] sm:$0xf]
    %v296 = vld [vmem:[#allocation6 + $0x10] sm:$0xf]
    %v297 = vld [vmem:[#allocation6 + $0x14] sm:$0xf]
    %v298 = vld [vmem:[#allocation6 + $0x18] sm:$0xf]
    %v299 = vld [vmem:[#allocation6 + $0x1c] sm:$0xf]
    %v300 = vld [vmem:[#allocation6 + $0x20] sm:$0xf]
    %v301 = vld [vmem:[#allocation6 + $0x24] sm:$0xf]
    %v302 = vld [vmem:[#allocation6 + $0x28] sm:$0xf]
    %v303 = vld [vmem:[#allocation6 + $0x2c] sm:$0xf]
    %v304 = vld [vmem:[#allocation6 + $0x30] sm:$0xf]
    %v305 = vld [vmem:[#allocation6 + $0x34] sm:$0xf]
    %v306 = vld [vmem:[#allocation6 + $0x38] sm:$0xf]
    %v307 = vld [vmem:[#allocation6 + $0x3c] sm:$0xf]
    %v308 = vld [vmem:[#allocation6 + $0x40] sm:$0xf]
    %v309 = vld [vmem:[#allocation6 + $0x44] sm:$0xf]
    %v310 = vld [vmem:[#allocation6 + $0x48] sm:$0xf]
    %v311 = vld [vmem:[#allocation6 + $0x4c] sm:$0xf]
    %v312 = vld [vmem:[#allocation6 + $0x50] sm:$0xf]
    %v313 = vld [vmem:[#allocation6 + $0x54] sm:$0xf]
    %v314 = vld [vmem:[#allocation6 + $0x58] sm:$0xf]
    %v315 = vld [vmem:[#allocation6 + $0x5c] sm:$0xf]
    %v316 = vld [vmem:[#allocation6 + $0x60] sm:$0xf]
    %v317 = vld [vmem:[#allocation6 + $0x64] sm:$0xf]
    %v318 = vld [vmem:[#allocation6 + $0x68] sm:$0xf]
    %v319 = vld [vmem:[#allocation6 + $0x6c] sm:$0xf]
    %v320 = vld [vmem:[#allocation6 + $0x70] sm:$0xf]
    %v321 = vld [vmem:[#allocation6 + $0x74] sm:$0xf]
    %v322 = vld [vmem:[#allocation6 + $0x78] sm:$0xf]
    %v323 = vld [vmem:[#allocation6 + $0x7c] sm:$0xf]
    %v324 = vld [vmem:[#allocation6 + $0x80] sm:$0xf]
    %v325 = vld [vmem:[#allocation6 + $0x84] sm:$0xf]
    %v326 = vld [vmem:[#allocation6 + $0x88] sm:$0xf]
    %v327 = vld [vmem:[#allocation6 + $0x8c] sm:$0xf]
    %v328 = vld [vmem:[#allocation6 + $0x90] sm:$0xf]
    %v329 = vld [vmem:[#allocation6 + $0x94] sm:$0xf]
    %v330 = vld [vmem:[#allocation6 + $0x98] sm:$0xf]
    %v331 = vld [vmem:[#allocation6 + $0x9c] sm:$0xf]
    %v332 = vld [vmem:[#allocation6 + $0xa0] sm:$0xf]
    %v333 = vld [vmem:[#allocation6 + $0xa4] sm:$0xf]
    %v334 = vld [vmem:[#allocation6 + $0xa8] sm:$0xf]
    %v335 = vld [vmem:[#allocation6 + $0xac] sm:$0xf]
    %v336 = vld [vmem:[#allocation6 + $0xb0] sm:$0xf]
    %v337 = vld [vmem:[#allocation6 + $0xb4] sm:$0xf]
    %v338 = vld [vmem:[#allocation6 + $0xb8] sm:$0xf]
    %v339 = vld [vmem:[#allocation6 + $0xbc] sm:$0xf]
    %v340 = vld [vmem:[#allocation6 + $0xc0] sm:$0xf]
    %v341 = vld [vmem:[#allocation6 + $0xc4] sm:$0xf]
    %v342 = vld [vmem:[#allocation6 + $0xc8] sm:$0xf]
    %v343 = vld [vmem:[#allocation6 + $0xcc] sm:$0xf]
    %v344 = vld [vmem:[#allocation6 + $0xd0] sm:$0xf]
    %v345 = vld [vmem:[#allocation6 + $0xd4] sm:$0xf]
    %v346 = vld [vmem:[#allocation6 + $0xd8] sm:$0xf]
    %v347 = vld [vmem:[#allocation6 + $0xdc] sm:$0xf]
    %v348 = vld [vmem:[#allocation6 + $0xe0] sm:$0xf]
    %v349 = vld [vmem:[#allocation6 + $0xe4] sm:$0xf]
    %v350 = vld [vmem:[#allocation6 + $0xe8] sm:$0xf]
    %v351 = vld [vmem:[#allocation6 + $0xec] sm:$0xf]
    %v352 = vld [vmem:[#allocation6 + $0xf0] sm:$0xf]
    %v353 = vld [vmem:[#allocation6 + $0xf4] sm:$0xf]
    %v354 = vld [vmem:[#allocation6 + $0xf8] sm:$0xf]
    %v355 = vld [vmem:[#allocation6 + $0xfc] sm:$0xf]
    %v356 = vld [vmem:[#allocation6 + $0x100] sm:$0xf]
    %v357 = vld [vmem:[#allocation6 + $0x104] sm:$0xf]
    %v358 = vld [vmem:[#allocation6 + $0x108] sm:$0xf]
    %v359 = vld [vmem:[#allocation6 + $0x10c] sm:$0xf]
    %v360 = vld [vmem:[#allocation6 + $0x110] sm:$0xf]
    %v361 = vld [vmem:[#allocation6 + $0x114] sm:$0xf]
    %v362 = vld [vmem:[#allocation6 + $0x118] sm:$0xf]
    %v363 = vld [vmem:[#allocation6 + $0x11c] sm:$0xf]
    %v364 = vld [vmem:[#allocation6 + $0x120] sm:$0xf]
    %v365 = vld [vmem:[#allocation6 + $0x124] sm:$0xf]
    %v366 = vld [vmem:[#allocation6 + $0x128] sm:$0xf]
    %v367 = vld [vmem:[#allocation6 + $0x12c] sm:$0xf]
    %v368 = vld [vmem:[#allocation6 + $0x130] sm:$0xf]
    %v369 = vld [vmem:[#allocation6 + $0x134] sm:$0xf]
    %v370 = vld [vmem:[#allocation6 + $0x138] sm:$0xf]
    %v371 = vld [vmem:[#allocation6 + $0x13c] sm:$0xf]
    %v372 = vld [vmem:[#allocation6 + $0x140] sm:$0xf]
    %v373 = vld [vmem:[#allocation6 + $0x144] sm:$0xf]
    %v374 = vld [vmem:[#allocation6 + $0x148] sm:$0xf]
    %v375 = vld [vmem:[#allocation6 + $0x14c] sm:$0xf]
    %v376 = vld [vmem:[#allocation6 + $0x150] sm:$0xf]
    %v377 = vld [vmem:[#allocation6 + $0x154] sm:$0xf]
    %v378 = vld [vmem:[#allocation6 + $0x158] sm:$0xf]
    %v379 = vld [vmem:[#allocation6 + $0x15c] sm:$0xf]
    %v380 = vld [vmem:[#allocation6 + $0x160] sm:$0xf]
    %v381 = vld [vmem:[#allocation6 + $0x164] sm:$0xf]
    %v382 = vld [vmem:[#allocation6 + $0x168] sm:$0xf]
    %v383 = vld [vmem:[#allocation6 + $0x16c] sm:$0xf]
    %v384 = vld [vmem:[#allocation6 + $0x170] sm:$0xf]
    %v385 = vld [vmem:[#allocation6 + $0x174] sm:$0xf]
    %v386 = vld [vmem:[#allocation6 + $0x178] sm:$0xf]
    %v387 = vld [vmem:[#allocation6 + $0x17c] sm:$0xf]
    %v388 = vld [vmem:[#allocation6 + $0x180] sm:$0xf]
    %v389 = vld [vmem:[#allocation6 + $0x184] sm:$0xf]
    %v390 = vld [vmem:[#allocation6 + $0x188] sm:$0xf]
    %v391 = vld [vmem:[#allocation6 + $0x18c] sm:$0xf]
    %v392 = vld [vmem:[#allocation6 + $0x190] sm:$0xf]
    %v393 = vld [vmem:[#allocation6 + $0x194] sm:$0xf]
    %v394 = vld [vmem:[#allocation6 + $0x198] sm:$0xf]
    %v395 = vld [vmem:[#allocation6 + $0x19c] sm:$0xf]
    %v396 = vld [vmem:[#allocation6 + $0x1a0] sm:$0xf]
    %v397 = vld [vmem:[#allocation6 + $0x1a4] sm:$0xf]
    %v398 = vld [vmem:[#allocation6 + $0x1a8] sm:$0xf]
    %v399 = vld [vmem:[#allocation6 + $0x1ac] sm:$0xf]
    %v400 = vld [vmem:[#allocation6 + $0x1b0] sm:$0xf]
    %v401 = vld [vmem:[#allocation6 + $0x1b4] sm:$0xf]
    %v402 = vld [vmem:[#allocation6 + $0x1b8] sm:$0xf]
    %v403 = vld [vmem:[#allocation6 + $0x1bc] sm:$0xf]
    %v404 = vld [vmem:[%s2] sm:$0x1]
    %v406 = vlaneseq
    %v407 = vshrl.u32 %v406, 7
    %v408 = vsub.s32 0, %v407
    %v409 = vrot.slane %v404, %v408
    %v523 = vunpack.c.l.b16 %v292
    %v524 = vunpack.c.l.b16 %v293
    %v525 = vunpack.c.l.b16 %v294
    %v526 = vunpack.c.l.b16 %v295
    %v527 = vunpack.c.l.b16 %v296
    %v528 = vunpack.c.l.b16 %v297
    %v529 = vunpack.c.l.b16 %v298
    %v530 = vunpack.c.l.b16 %v299
    %v531 = vunpack.c.l.b16 %v300
    %v532 = vunpack.c.l.b16 %v301
    %v533 = vunpack.c.l.b16 %v302
    %v534 = vunpack.c.l.b16 %v303
    %v535 = vunpack.c.l.b16 %v304
    %v536 = vunpack.c.l.b16 %v305
    %v537 = vunpack.c.l.b16 %v306
    %v538 = vunpack.c.l.b16 %v307
    %v539 = vunpack.c.l.b16 %v308
    %v540 = vunpack.c.l.b16 %v309
    %v541 = vunpack.c.l.b16 %v310
    %v542 = vunpack.c.l.b16 %v311
    %v543 = vunpack.c.l.b16 %v312
    %v544 = vunpack.c.l.b16 %v313
    %v545 = vunpack.c.l.b16 %v314
    %v546 = vunpack.c.l.b16 %v315
    %v547 = vunpack.c.l.b16 %v316
    %v548 = vunpack.c.l.b16 %v317
    %v549 = vunpack.c.l.b16 %v318
    %v550 = vunpack.c.l.b16 %v319
    %v551 = vunpack.c.l.b16 %v320
    %v552 = vunpack.c.l.b16 %v321
    %v553 = vunpack.c.l.b16 %v322
    %v554 = vunpack.c.l.b16 %v323
    %v555 = vunpack.c.l.b16 %v324
    %v556 = vunpack.c.l.b16 %v325
    %v557 = vunpack.c.l.b16 %v326
    %v558 = vunpack.c.l.b16 %v327
    %v559 = vunpack.c.l.b16 %v328
    %v560 = vunpack.c.l.b16 %v329
    %v561 = vunpack.c.l.b16 %v330
    %v562 = vunpack.c.l.b16 %v331
    %v563 = vunpack.c.l.b16 %v332
    %v564 = vunpack.c.l.b16 %v333
    %v565 = vunpack.c.l.b16 %v334
    %v566 = vunpack.c.l.b16 %v335
    %v567 = vunpack.c.l.b16 %v336
    %v568 = vunpack.c.l.b16 %v337
    %v569 = vunpack.c.l.b16 %v338
    %v570 = vunpack.c.l.b16 %v339
    %v571 = vunpack.c.l.b16 %v340
    %v572 = vunpack.c.l.b16 %v341
    %v573 = vunpack.c.l.b16 %v342
    %v574 = vunpack.c.l.b16 %v343
    %v575 = vunpack.c.l.b16 %v344
    %v576 = vunpack.c.l.b16 %v345
    %v577 = vunpack.c.l.b16 %v346
    %v578 = vunpack.c.l.b16 %v347
    %v579 = vunpack.c.l.b16 %v348
    %v580 = vunpack.c.l.b16 %v349
    %v581 = vunpack.c.l.b16 %v350
    %v582 = vunpack.c.l.b16 %v351
    %v583 = vunpack.c.l.b16 %v352
    %v584 = vunpack.c.l.b16 %v353
    %v585 = vunpack.c.l.b16 %v354
    %v586 = vunpack.c.l.b16 %v355
    %v587 = vunpack.c.l.b16 %v356
    %v588 = vunpack.c.l.b16 %v357
    %v589 = vunpack.c.l.b16 %v358
    %v590 = vunpack.c.l.b16 %v359
    %v591 = vunpack.c.l.b16 %v360
    %v592 = vunpack.c.l.b16 %v361
    %v593 = vunpack.c.l.b16 %v362
    %v594 = vunpack.c.l.b16 %v363
    %v595 = vunpack.c.l.b16 %v364
    %v596 = vunpack.c.l.b16 %v365
    %v597 = vunpack.c.l.b16 %v366
    %v598 = vunpack.c.l.b16 %v367
    %v599 = vunpack.c.l.b16 %v368
    %v600 = vunpack.c.l.b16 %v369
    %v601 = vunpack.c.l.b16 %v370
    %v602 = vunpack.c.l.b16 %v371
    %v603 = vunpack.c.l.b16 %v372
    %v604 = vunpack.c.l.b16 %v373
    %v605 = vunpack.c.l.b16 %v374
    %v606 = vunpack.c.l.b16 %v375
    %v607 = vunpack.c.l.b16 %v376
    %v608 = vunpack.c.l.b16 %v377
    %v609 = vunpack.c.l.b16 %v378
    %v610 = vunpack.c.l.b16 %v379
    %v611 = vunpack.c.l.b16 %v380
    %v612 = vunpack.c.l.b16 %v381
    %v613 = vunpack.c.l.b16 %v382
    %v614 = vunpack.c.l.b16 %v383
    %v615 = vunpack.c.l.b16 %v384
    %v616 = vunpack.c.l.b16 %v385
    %v617 = vunpack.c.l.b16 %v386
    %v618 = vunpack.c.l.b16 %v387
    %v619 = vunpack.c.l.b16 %v388
    %v620 = vunpack.c.l.b16 %v389
    %v621 = vunpack.c.l.b16 %v390
    %v622 = vunpack.c.l.b16 %v391
    %v623 = vunpack.c.l.b16 %v392
    %v624 = vunpack.c.l.b16 %v393
    %v625 = vunpack.c.l.b16 %v394
    %v626 = vunpack.c.l.b16 %v395
    %v627 = vunpack.c.l.b16 %v396
    %v628 = vunpack.c.l.b16 %v397
    %v629 = vunpack.c.l.b16 %v398
    %v630 = vunpack.c.l.b16 %v399
    %v631 = vunpack.c.l.b16 %v400
    %v632 = vunpack.c.l.b16 %v401
    %v633 = vunpack.c.l.b16 %v402
    %v634 = vunpack.c.l.b16 %v403
    %v635 = vpack.c.b16 %v524, %v523
    %v636 = vpack.c.b16 %v526, %v525
    %v637 = vpack.c.b16 %v528, %v527
    %v638 = vpack.c.b16 %v530, %v529
    %v639 = vpack.c.b16 %v532, %v531
    %v640 = vpack.c.b16 %v534, %v533
    %v641 = vpack.c.b16 %v536, %v535
    %v642 = vpack.c.b16 %v538, %v537
    %v643 = vpack.c.b16 %v540, %v539
    %v644 = vpack.c.b16 %v542, %v541
    %v645 = vpack.c.b16 %v544, %v543
    %v646 = vpack.c.b16 %v546, %v545
    %v647 = vpack.c.b16 %v548, %v547
    %v648 = vpack.c.b16 %v550, %v549
    %v649 = vpack.c.b16 %v552, %v551
    %v650 = vpack.c.b16 %v554, %v553
    %v651 = vpack.c.b16 %v556, %v555
    %v652 = vpack.c.b16 %v558, %v557
    %v653 = vpack.c.b16 %v560, %v559
    %v654 = vpack.c.b16 %v562, %v561
    %v655 = vpack.c.b16 %v564, %v563
    %v656 = vpack.c.b16 %v566, %v565
    %v657 = vpack.c.b16 %v568, %v567
    %v658 = vpack.c.b16 %v570, %v569
    %v659 = vpack.c.b16 %v572, %v571
    %v660 = vpack.c.b16 %v574, %v573
    %v661 = vpack.c.b16 %v576, %v575
    %v662 = vpack.c.b16 %v578, %v577
    %v663 = vpack.c.b16 %v580, %v579
    %v664 = vpack.c.b16 %v582, %v581
    %v665 = vpack.c.b16 %v584, %v583
    %v666 = vpack.c.b16 %v586, %v585
    %v667 = vpack.c.b16 %v588, %v587
    %v668 = vpack.c.b16 %v590, %v589
    %v669 = vpack.c.b16 %v592, %v591
    %v670 = vpack.c.b16 %v594, %v593
    %v671 = vpack.c.b16 %v596, %v595
    %v672 = vpack.c.b16 %v598, %v597
    %v673 = vpack.c.b16 %v600, %v599
    %v674 = vpack.c.b16 %v602, %v601
    %v675 = vpack.c.b16 %v604, %v603
    %v676 = vpack.c.b16 %v606, %v605
    %v677 = vpack.c.b16 %v608, %v607
    %v678 = vpack.c.b16 %v610, %v609
    %v679 = vpack.c.b16 %v612, %v611
    %v680 = vpack.c.b16 %v614, %v613
    %v681 = vpack.c.b16 %v616, %v615
    %v682 = vpack.c.b16 %v618, %v617
    %v683 = vpack.c.b16 %v620, %v619
    %v684 = vpack.c.b16 %v622, %v621
    %v685 = vpack.c.b16 %v624, %v623
    %v686 = vpack.c.b16 %v626, %v625
    %v687 = vpack.c.b16 %v628, %v627
    %v688 = vpack.c.b16 %v630, %v629
    %v689 = vpack.c.b16 %v632, %v631
    %v690 = vpack.c.b16 %v634, %v633
    %747 = vmatprep.subr.bf16.mxu0 0
    %748 = vmatpush1.bf16.msra.mxu0 %v635
    %749 = vmatprep.subr.bf16.mxu0 0
    %750 = vmatpush1.bf16.msra.mxu0 %v636
    %751 = vmatprep.subr.bf16.mxu0 0
    %752 = vmatpush1.bf16.msra.mxu0 %v637
    %753 = vmatprep.subr.bf16.mxu0 0
    %754 = vmatpush1.bf16.msra.mxu0 %v638
    %755 = vmatprep.subr.bf16.mxu0 0
    %756 = vmatpush1.bf16.msra.mxu0 %v639
    %757 = vmatprep.subr.bf16.mxu0 0
    %758 = vmatpush1.bf16.msra.mxu0 %v640
    %759 = vmatprep.subr.bf16.mxu0 0
    %760 = vmatpush1.bf16.msra.mxu0 %v641
    %761 = vmatprep.subr.bf16.mxu0 0
    %762 = vmatpush1.bf16.msra.mxu0 %v642
    %763 = vmatprep.subr.bf16.mxu0 0
    %764 = vmatpush1.bf16.msra.mxu0 %v643
    %765 = vmatprep.subr.bf16.mxu0 0
    %766 = vmatpush1.bf16.msra.mxu0 %v644
    %767 = vmatprep.subr.bf16.mxu0 0
    %768 = vmatpush1.bf16.msra.mxu0 %v645
    %769 = vmatprep.subr.bf16.mxu0 0
    %770 = vmatpush1.bf16.msra.mxu0 %v646
    %771 = vmatprep.subr.bf16.mxu0 0
    %772 = vmatpush1.bf16.msra.mxu0 %v647
    %773 = vmatprep.subr.bf16.mxu0 0
    %774 = vmatpush1.bf16.msra.mxu0 %v648
    %775 = vmatprep.subr.bf16.mxu0 0
    %776 = vmatpush1.bf16.msra.mxu0 %v649
    %777 = vmatprep.subr.bf16.mxu0 0
    %778 = vmatpush1.bf16.msra.mxu0 %v650
    %779 = vmatprep.mubr.bf16.mxu0 %v279
    %780 = vmatmul.mubr.bf16.gmra.mrb[0].mxu0 %v278
    %v781 = vpop.f32.mrb[0].mxu0
    %v782 = vadd.f32 %v409, %v781
    %v783 = vpop.f32.mrb[0].mxu0
    %v784 = vpop.f32.mrb[0].mxu0
    %v785 = vadd.f32 %v409, %v784
    %v786 = vpop.f32.mrb[0].mxu0
    %787 = vmatprep.mubr.bf16.mxu0 %v286
    %788 = vmatmul.mubr.bf16.gmra.mrb[0].mxu0 %v285
    %v789 = vpop.f32.mrb[0].mxu0
    %v790 = vadd.f32 %v409, %v789
    %v791 = vpop.f32.mrb[0].mxu0
    %v792 = vpop.f32.mrb[0].mxu0
    %v793 = vadd.f32 %v409, %v792
    %v794 = vpop.f32.mrb[0].mxu0
    %795 = vdwg.mxu0
    %796 = vmatprep.subr.bf16.mxu0 0
    %797 = vmatpush1.bf16.msra.mxu0 %v651
    %798 = vmatprep.subr.bf16.mxu0 0
    %799 = vmatpush1.bf16.msra.mxu0 %v652
    %800 = vmatprep.subr.bf16.mxu0 0
    %801 = vmatpush1.bf16.msra.mxu0 %v653
    %802 = vmatprep.subr.bf16.mxu0 0
    %803 = vmatpush1.bf16.msra.mxu0 %v654
    %804 = vmatprep.subr.bf16.mxu0 0
    %805 = vmatpush1.bf16.msra.mxu0 %v655
    %806 = vmatprep.subr.bf16.mxu0 0
    %807 = vmatpush1.bf16.msra.mxu0 %v656
    %808 = vmatprep.subr.bf16.mxu0 0
    %809 = vmatpush1.bf16.msra.mxu0 %v657
    %810 = vmatprep.subr.bf16.mxu0 0
    %811 = vmatpush1.bf16.msra.mxu0 %v658
    %812 = vmatprep.subr.bf16.mxu0 0
    %813 = vmatpush1.bf16.msra.mxu0 %v659
    %814 = vmatprep.subr.bf16.mxu0 0
    %815 = vmatpush1.bf16.msra.mxu0 %v660
    %816 = vmatprep.subr.bf16.mxu0 0
    %817 = vmatpush1.bf16.msra.mxu0 %v661
    %818 = vmatprep.subr.bf16.mxu0 0
    %819 = vmatpush1.bf16.msra.mxu0 %v662
    %820 = vmatprep.subr.bf16.mxu0 0
    %821 = vmatpush1.bf16.msra.mxu0 %v663
    %822 = vmatprep.subr.bf16.mxu0 0
    %823 = vmatpush1.bf16.msra.mxu0 %v664
    %824 = vmatprep.subr.bf16.mxu0 0
    %825 = vmatpush1.bf16.msra.mxu0 %v665
    %826 = vmatprep.subr.bf16.mxu0 0
    %827 = vmatpush1.bf16.msra.mxu0 %v666
    %828 = vmatprep.mubr.bf16.mxu0 %v281
    %829 = vmatmul.mubr.bf16.gmra.mrb[0].mxu0 %v280
    %v830 = vpop.f32.mrb[0].mxu0
    %v831 = vadd.f32 %v782, %v830
    %v832 = vpop.f32.mrb[0].mxu0
    %v833 = vpop.f32.mrb[0].mxu0
    %v834 = vadd.f32 %v785, %v833
    %v835 = vpop.f32.mrb[0].mxu0
    %836 = vmatprep.mubr.bf16.mxu0 %v288
    %837 = vmatmul.mubr.bf16.gmra.mrb[0].mxu0 %v287
    %v838 = vpop.f32.mrb[0].mxu0
    %v839 = vadd.f32 %v790, %v838
    %v840 = vpop.f32.mrb[0].mxu0
    %v841 = vpop.f32.mrb[0].mxu0
    %v842 = vadd.f32 %v793, %v841
    %v843 = vpop.f32.mrb[0].mxu0
    %844 = vdwg.mxu0
    %845 = vmatprep.subr.bf16.mxu0 0
    %846 = vmatpush1.bf16.msra.mxu0 %v667
    %847 = vmatprep.subr.bf16.mxu0 0
    %848 = vmatpush1.bf16.msra.mxu0 %v668
    %849 = vmatprep.subr.bf16.mxu0 0
    %850 = vmatpush1.bf16.msra.mxu0 %v669
    %851 = vmatprep.subr.bf16.mxu0 0
    %852 = vmatpush1.bf16.msra.mxu0 %v670
    %853 = vmatprep.subr.bf16.mxu0 0
    %854 = vmatpush1.bf16.msra.mxu0 %v671
    %855 = vmatprep.subr.bf16.mxu0 0
    %856 = vmatpush1.bf16.msra.mxu0 %v672
    %857 = vmatprep.subr.bf16.mxu0 0
    %858 = vmatpush1.bf16.msra.mxu0 %v673
    %859 = vmatprep.subr.bf16.mxu0 0
    %860 = vmatpush1.bf16.msra.mxu0 %v674
    %861 = vmatprep.subr.bf16.mxu0 0
    %862 = vmatpush1.bf16.msra.mxu0 %v675
    %863 = vmatprep.subr.bf16.mxu0 0
    %864 = vmatpush1.bf16.msra.mxu0 %v676
    %865 = vmatprep.subr.bf16.mxu0 0
    %866 = vmatpush1.bf16.msra.mxu0 %v677
    %867 = vmatprep.subr.bf16.mxu0 0
    %868 = vmatpush1.bf16.msra.mxu0 %v678
    %869 = vmatprep.subr.bf16.mxu0 0
    %870 = vmatpush1.bf16.msra.mxu0 %v679
    %871 = vmatprep.subr.bf16.mxu0 0
    %872 = vmatpush1.bf16.msra.mxu0 %v680
    %873 = vmatprep.subr.bf16.mxu0 0
    %874 = vmatpush1.bf16.msra.mxu0 %v681
    %875 = vmatprep.subr.bf16.mxu0 0
    %876 = vmatpush1.bf16.msra.mxu0 %v682
    %877 = vmatprep.mubr.bf16.mxu0 %v283
    %878 = vmatmul.mubr.bf16.gmra.mrb[0].mxu0 %v282
    %v879 = vpop.f32.mrb[0].mxu0
    %v880 = vadd.f32 %v831, %v879
    %v881 = vpop.f32.mrb[0].mxu0
    %v882 = vpop.f32.mrb[0].mxu0
    %v883 = vadd.f32 %v834, %v882
    %v884 = vpop.f32.mrb[0].mxu0
    %885 = vmatprep.mubr.bf16.mxu0 %v290
    %886 = vmatmul.mubr.bf16.gmra.mrb[0].mxu0 %v289
    %v887 = vpop.f32.mrb[0].mxu0
    %v888 = vadd.f32 %v839, %v887
    %v889 = vpop.f32.mrb[0].mxu0
    %v890 = vpop.f32.mrb[0].mxu0
    %v891 = vadd.f32 %v842, %v890
    %v892 = vpop.f32.mrb[0].mxu0
    %893 = vdwg.mxu0
    %894 = vmatprep.subr.bf16.mxu0 0
    %895 = vmatpush1.bf16.msra.mxu0 %v683
    %896 = vmatprep.subr.bf16.mxu0 0
    %897 = vmatpush1.bf16.msra.mxu0 %v684
    %898 = vmatprep.subr.bf16.mxu0 0
    %899 = vmatpush1.bf16.msra.mxu0 %v685
    %900 = vmatprep.subr.bf16.mxu0 0
    %901 = vmatpush1.bf16.msra.mxu0 %v686
    %902 = vmatprep.subr.bf16.mxu0 0
    %903 = vmatpush1.bf16.msra.mxu0 %v687
    %904 = vmatprep.subr.bf16.mxu0 0
    %905 = vmatpush1.bf16.msra.mxu0 %v688
    %906 = vmatprep.subr.bf16.mxu0 0
    %907 = vmatpush1.bf16.msra.mxu0 %v689
    %908 = vmatprep.subr.bf16.mxu0 0
    %909 = vmatpush1.bf16.msra.mxu0 %v690
    %910 = vmatprep.subr.bf16.mxu0 0
    %911 = vmatpush1.bf16.msra.mxu0 0
    %912 = vmatprep.subr.bf16.mxu0 0
    %913 = vmatpush1.bf16.msra.mxu0 0
    %914 = vmatprep.subr.bf16.mxu0 0
    %915 = vmatpush1.bf16.msra.mxu0 0
    %916 = vmatprep.subr.bf16.mxu0 0
    %917 = vmatpush1.bf16.msra.mxu0 0
    %918 = vmatprep.subr.bf16.mxu0 0
    %919 = vmatpush1.bf16.msra.mxu0 0
    %920 = vmatprep.subr.bf16.mxu0 0
    %921 = vmatpush1.bf16.msra.mxu0 0
    %922 = vmatprep.subr.bf16.mxu0 0
    %923 = vmatpush1.bf16.msra.mxu0 0
    %924 = vmatprep.subr.bf16.mxu0 0
    %925 = vmatpush1.bf16.msra.mxu0 0
    %926 = vmatprep.mubr.bf16.mxu0 0
    %927 = vmatmul.mubr.bf16.gmra.mrb[0].mxu0 %v284
    %v928 = vpop.f32.mrb[0].mxu0
    %v929 = vadd.f32 %v880, %v928
    %v930 = vpop.f32.mrb[0].mxu0
    %v931 = vpop.f32.mrb[0].mxu0
    %v932 = vadd.f32 %v883, %v931
    %v933 = vpop.f32.mrb[0].mxu0
    %934 = vmatprep.mubr.bf16.mxu0 0
    %935 = vmatmul.mubr.bf16.gmra.mrb[0].mxu0 %v291
    %v936 = vpop.f32.mrb[0].mxu0
    %v937 = vadd.f32 %v888, %v936
    %v938 = vpop.f32.mrb[0].mxu0
    %v939 = vpop.f32.mrb[0].mxu0
    %v940 = vadd.f32 %v891, %v939
    %v941 = vpop.f32.mrb[0].mxu0
    %942 = vdwg.mxu0
    %v943 = vadd.f32 %v929, %v932
    %v944 = vadd.f32 %v943, %v937
    %v945 = vadd.f32 %v944, %v940
    %v946 = vrot.slane %v945, 4
    %v947 = vadd.f32 %v945, %v946
    %v948 = vrot.slane %v947, 2
    %v949 = vadd.f32 %v947, %v948
    %v950 = vrot.slane %v949, 1
    %v951 = vadd.f32 %v949, %v950
    %v952 = vmul.f32 %v951, 0.03125
    %v953 = vmul.f32 %v929, %v929
    %v954 = vmul.f32 %v932, %v932
    %v955 = vmul.f32 %v937, %v937
    %v956 = vmul.f32 %v940, %v940
    %v957 = vadd.f32 %v953, %v954
    %v958 = vadd.f32 %v957, %v955
    %v959 = vadd.f32 %v958, %v956
    %v960 = vrot.slane %v959, 4
    %v961 = vadd.f32 %v959, %v960
    %v962 = vrot.slane %v961, 2
    %v963 = vadd.f32 %v961, %v962
    %v964 = vrot.slane %v963, 1
    %v965 = vadd.f32 %v963, %v964
    %v966 = vmul.f32 %v965, 0.03125
    %v967 = vmul.f32 %v952, %v952
    %v968 = vsub.f32 %v966, %v967
    %v969 = vsub.f32 %v929, %v952
    %v970 = vsub.f32 %v932, %v952
    %v971 = vsub.f32 %v937, %v952
    %v972 = vsub.f32 %v940, %v952
    %v973 = vadd.f32 %v968, 1e-05
    %v974 = vrsqrt.pop %v973
    %v975 = vmul.f32 %v969, %v974
    %v976 = vmul.f32 %v970, %v974
    %v977 = vmul.f32 %v971, %v974
    %v978 = vmul.f32 %v972, %v974
    %v979 = vld [vmem:[%s3] sm:$0x1]
    %v981 = vlaneseq
    %v982 = vshrl.u32 %v981, 7
    %v983 = vsub.s32 0, %v982
    %v984 = vrot.slane %v979, %v983
    %v986 = vmul.f32 %v975, %v984
    %v987 = vmul.f32 %v976, %v984
    %v988 = vmul.f32 %v977, %v984
    %v989 = vmul.f32 %v978, %v984
    %v990 = vld [vmem:[%s4] sm:$0x1]
    %v992 = vlaneseq
    %v993 = vshrl.u32 %v992, 7
    %v994 = vsub.s32 0, %v993
    %v995 = vrot.slane %v990, %v994
    %v997 = vadd.f32 %v986, %v995
    %v998 = vadd.f32 %v987, %v995
    %v999 = vadd.f32 %v988, %v995
    %v1000 = vadd.f32 %v989, %v995
    %v1001 = vmax.f32 %v997, 0.0
    %v1002 = vmax.f32 %v998, 0.0
    %v1003 = vmax.f32 %v999, 0.0
    %v1004 = vmax.f32 %v1000, 0.0
    %1005 = vst [vmem:[#allocation2] sm:$0xff] 0.0
    %1006 = vst [vmem:[#allocation2 + $0x8] sm:$0xff] 0.0
    %1007 = vst [vmem:[#allocation2 + $0x10] sm:$0xff] 0.0
    %1008 = vst [vmem:[#allocation2 + $0x18] sm:$0xff] 0.0
    %1009 = vst [vmem:[#allocation2 + $0x20] sm:$0xff] 0.0
    %1010 = vst [vmem:[#allocation2 + $0x28] sm:$0xff] 0.0
    %1011 = vst [vmem:[#allocation2 + $0x30] sm:$0xff] 0.0
    %1012 = vst [vmem:[#allocation2 + $0x38] sm:$0xff] 0.0
    %1013 = vst [vmem:[#allocation2 + $0x40] sm:$0xff] 0.0
    %1014 = vst [vmem:[#allocation2 + $0x48] sm:$0xff] 0.0
    %1015 = vst [vmem:[#allocation2 + $0x50] sm:$0xff] 0.0
    %1016 = vst [vmem:[#allocation2 + $0x58] sm:$0xff] 0.0
    %1017 = vst [vmem:[#allocation2 + $0x60] sm:$0xff] 0.0
    %1018 = vst [vmem:[#allocation2 + $0x68] sm:$0xff] 0.0
    %1019 = vst [vmem:[#allocation2 + $0x70] sm:$0xff] 0.0
    %1020 = vst [vmem:[#allocation2 + $0x78] sm:$0xff] 0.0
    %1021 = vst [vmem:[#allocation2 + $0x80] sm:$0xff] 0.0
    %1022 = vst [vmem:[#allocation2 + $0x88] sm:$0xff] 0.0
    %1023 = vst [vmem:[#allocation2 + $0x90] sm:$0xff] 0.0
    %1024 = vst [vmem:[#allocation2 + $0x98] sm:$0xff] 0.0
    %1025 = vst [vmem:[#allocation2 + $0xa0] sm:$0xff] 0.0
    %1026 = vst [vmem:[#allocation2 + $0xa8] sm:$0xff] 0.0
    %1027 = vst [vmem:[#allocation2 + $0xb0] sm:$0xff] 0.0
    %1028 = vst [vmem:[#allocation2 + $0xb8] sm:$0xff] 0.0
    %1029 = vst [vmem:[#allocation2 + $0xc0] sm:$0xff] 0.0
    %1030 = vst [vmem:[#allocation2 + $0xc8] sm:$0xff] 0.0
    %1031 = vst [vmem:[#allocation2 + $0xd0] sm:$0xff] 0.0
    %1032 = vst [vmem:[#allocation2 + $0xd8] sm:$0xff] 0.0
    %v1037 = vrot.slane %v1001, 5
    %v1038 = vrot.slane %v1002, 5
    %v1039 = vsel %vm156, %v1037, %v1038
    %v1040 = vrot.slane %v1003, 5
    %v1041 = vrot.slane %v1004, 5
    %v1042 = vsel %vm156, %v1040, %v1041
    %1047 = vst [vmem:[#allocation2] sm:$0xf8] %v1037
    %1048 = vst [vmem:[#allocation2 + $0x38] sm:$0xff] %v1039
    %1049 = vst [vmem:[#allocation2 + $0x70] sm:$0xf8] %v1040
    %1050 = vst [vmem:[#allocation2 + $0xa8] sm:$0xff] %v1042
    %v1051 = vrot.slane %v1001, 6
    %v1052 = vrot.slane %v1002, 6
    %v1053 = vsel %vm171, %v1051, %v1052
    %v1054 = vrot.slane %v1003, 6
    %v1055 = vrot.slane %v1004, 6
    %v1056 = vsel %vm171, %v1054, %v1055
    %1061 = vst [vmem:[#allocation2 + $0x8] sm:$0xfc] %v1051
    %1062 = vst [vmem:[#allocation2 + $0x40] sm:$0xff] %v1053
    %1063 = vst [vmem:[#allocation2 + $0x78] sm:$0xfc] %v1054
    %1064 = vst [vmem:[#allocation2 + $0xb0] sm:$0xff] %v1056
    %v1065 = vrot.slane %v1001, 7
    %v1066 = vrot.slane %v1002, 7
    %v1067 = vsel %vm186, %v1065, %v1066
    %v1068 = vrot.slane %v1003, 7
    %v1069 = vrot.slane %v1004, 7
    %v1070 = vsel %vm186, %v1068, %v1069
    %1075 = vst [vmem:[#allocation2 + $0x10] sm:$0xfe] %v1065
    %1076 = vst [vmem:[#allocation2 + $0x48] sm:$0xff] %v1067
    %1077 = vst [vmem:[#allocation2 + $0x80] sm:$0xfe] %v1068
    %1078 = vst [vmem:[#allocation2 + $0xb8] sm:$0xff] %v1070
    %1079 = vst [vmem:[#allocation2 + $0x18] sm:$0xff] %v1001
    %1080 = vst [vmem:[#allocation2 + $0x50] sm:$0xff] %v1002
    %1081 = vst [vmem:[#allocation2 + $0x88] sm:$0xff] %v1003
    %1082 = vst [vmem:[#allocation2 + $0xc0] sm:$0xff] %v1004
    %v1083 = vrot.slane %v1001, 1
    %v1084 = vrot.slane %v1002, 1
    %v1085 = vsel %vm205, %v1083, %v1084
    %v1086 = vrot.slane %v1003, 1
    %v1087 = vrot.slane %v1004, 1
    %v1088 = vsel %vm205, %v1086, %v1087
    %1093 = vst [vmem:[#allocation2 + $0x20] sm:$0xff] %v1085
    %1094 = vst [vmem:[#allocation2 + $0x58] sm:$0x7f] %v1084
    %1095 = vst [vmem:[#allocation2 + $0x90] sm:$0xff] %v1088
    %1096 = vst [vmem:[#allocation2 + $0xc8] sm:$0x7f] %v1087
    %v1097 = vrot.slane %v1001, 2
    %v1098 = vrot.slane %v1002, 2
    %v1099 = vsel %vm220, %v1097, %v1098
    %v1100 = vrot.slane %v1003, 2
    %v1101 = vrot.slane %v1004, 2
    %v1102 = vsel %vm220, %v1100, %v1101
    %1107 = vst [vmem:[#allocation2 + $0x28] sm:$0xff] %v1099
    %1108 = vst [vmem:[#allocation2 + $0x60] sm:$0x3f] %v1098
    %1109 = vst [vmem:[#allocation2 + $0x98] sm:$0xff] %v1102
    %1110 = vst [vmem:[#allocation2 + $0xd0] sm:$0x3f] %v1101
    %v1111 = vrot.slane %v1001, 3
    %v1112 = vrot.slane %v1002, 3
    %v1113 = vsel %vm235, %v1111, %v1112
    %v1114 = vrot.slane %v1003, 3
    %v1115 = vrot.slane %v1004, 3
    %v1116 = vsel %vm235, %v1114, %v1115
    %1121 = vst [vmem:[#allocation2 + $0x30] sm:$0xff] %v1113
    %1122 = vst [vmem:[#allocation2 + $0x68] sm:$0x1f] %v1112
    %1123 = vst [vmem:[#allocation2 + $0xa0] sm:$0xff] %v1116
    %1124 = vst [vmem:[#allocation2 + $0xd8] sm:$0x1f] %v1115
    %v1125 = vld [vmem:[#allocation2] sm:$0xff]
    %v1126 = vld [vmem:[#allocation2 + $0x8] sm:$0xff]
    %v1127 = vld [vmem:[#allocation2 + $0x10] sm:$0xff]
    %v1128 = vld [vmem:[#allocation2 + $0x18] sm:$0xff]
    %v1129 = vld [vmem:[#allocation2 + $0x20] sm:$0xff]
    %v1130 = vld [vmem:[#allocation2 + $0x28] sm:$0xff]
    %v1131 = vld [vmem:[#allocation2 + $0x30] sm:$0xff]
    %v1132 = vld [vmem:[#allocation2 + $0x38] sm:$0xff]
    %v1133 = vld [vmem:[#allocation2 + $0x40] sm:$0xff]
    %v1134 = vld [vmem:[#allocation2 + $0x48] sm:$0xff]
    %v1135 = vld [vmem:[#allocation2 + $0x50] sm:$0xff]
    %v1136 = vld [vmem:[#allocation2 + $0x58] sm:$0xff]
    %v1137 = vld [vmem:[#allocation2 + $0x60] sm:$0xff]
    %v1138 = vld [vmem:[#allocation2 + $0x68] sm:$0xff]
    %v1139 = vld [vmem:[#allocation2 + $0x70] sm:$0xff]
    %v1140 = vld [vmem:[#allocation2 + $0x78] sm:$0xff]
    %v1141 = vld [vmem:[#allocation2 + $0x80] sm:$0xff]
    %v1142 = vld [vmem:[#allocation2 + $0x88] sm:$0xff]
    %v1143 = vld [vmem:[#allocation2 + $0x90] sm:$0xff]
    %v1144 = vld [vmem:[#allocation2 + $0x98] sm:$0xff]
    %v1145 = vld [vmem:[#allocation2 + $0xa0] sm:$0xff]
    %v1146 = vld [vmem:[#allocation2 + $0xa8] sm:$0xff]
    %v1147 = vld [vmem:[#allocation2 + $0xb0] sm:$0xff]
    %v1148 = vld [vmem:[#allocation2 + $0xb8] sm:$0xff]
    %v1149 = vld [vmem:[#allocation2 + $0xc0] sm:$0xff]
    %v1150 = vld [vmem:[#allocation2 + $0xc8] sm:$0xff]
    %v1151 = vld [vmem:[#allocation2 + $0xd0] sm:$0xff]
    %v1152 = vld [vmem:[#allocation2 + $0xd8] sm:$0xff]
    %v1153 = vpack.c.bf16 %v1132, %v1125
    %v1154 = vpack.c.bf16 %v1133, %v1126
    %v1155 = vpack.c.bf16 %v1134, %v1127
    %v1156 = vpack.c.bf16 %v1135, %v1128
    %v1157 = vpack.c.bf16 %v1136, %v1129
    %v1158 = vpack.c.bf16 %v1137, %v1130
    %v1159 = vpack.c.bf16 %v1138, %v1131
    %v1160 = vpack.c.bf16 %v1146, %v1139
    %v1161 = vpack.c.bf16 %v1147, %v1140
    %v1162 = vpack.c.bf16 %v1148, %v1141
    %v1163 = vpack.c.bf16 %v1149, %v1142
    %v1164 = vpack.c.bf16 %v1150, %v1143
    %v1165 = vpack.c.bf16 %v1151, %v1144
    %v1166 = vpack.c.bf16 %v1152, %v1145
    %v1167 = vld [vmem:[#allocation8] sm:$0xf]
    %v1168 = vld [vmem:[#allocation8 + $0x4] sm:$0xf]
    %v1169 = vld [vmem:[#allocation8 + $0x8] sm:$0xf]
    %v1170 = vld [vmem:[#allocation8 + $0xc] sm:$0xf]
    %v1171 = vld [vmem:[#allocation8 + $0x10] sm:$0xf]
    %v1172 = vld [vmem:[#allocation8 + $0x14] sm:$0xf]
    %v1173 = vld [vmem:[#allocation8 + $0x18] sm:$0xf]
    %v1174 = vld [vmem:[#allocation8 + $0x1c] sm:$0xf]
    %v1175 = vld [vmem:[#allocation8 + $0x20] sm:$0xf]
    %v1176 = vld [vmem:[#allocation8 + $0x24] sm:$0xf]
    %v1177 = vld [vmem:[#allocation8 + $0x28] sm:$0xf]
    %v1178 = vld [vmem:[#allocation8 + $0x2c] sm:$0xf]
    %v1179 = vld [vmem:[#allocation8 + $0x30] sm:$0xf]
    %v1180 = vld [vmem:[#allocation8 + $0x34] sm:$0xf]
    %v1181 = vld [vmem:[#allocation8 + $0x38] sm:$0xf]
    %v1182 = vld [vmem:[#allocation8 + $0x3c] sm:$0xf]
    %v1183 = vld [vmem:[#allocation8 + $0x40] sm:$0xf]
    %v1184 = vld [vmem:[#allocation8 + $0x44] sm:$0xf]
    %v1185 = vld [vmem:[#allocation8 + $0x48] sm:$0xf]
    %v1186 = vld [vmem:[#allocation8 + $0x4c] sm:$0xf]
    %v1187 = vld [vmem:[#allocation8 + $0x50] sm:$0xf]
    %v1188 = vld [vmem:[#allocation8 + $0x54] sm:$0xf]
    %v1189 = vld [vmem:[#allocation8 + $0x58] sm:$0xf]
    %v1190 = vld [vmem:[#allocation8 + $0x5c] sm:$0xf]
    %v1191 = vld [vmem:[#allocation8 + $0x60] sm:$0xf]
    %v1192 = vld [vmem:[#allocation8 + $0x64] sm:$0xf]
    %v1193 = vld [vmem:[#allocation8 + $0x68] sm:$0xf]
    %v1194 = vld [vmem:[#allocation8 + $0x6c] sm:$0xf]
    %v1195 = vld [vmem:[#allocation8 + $0x70] sm:$0xf]
    %v1196 = vld [vmem:[#allocation8 + $0x74] sm:$0xf]
    %v1197 = vld [vmem:[#allocation8 + $0x78] sm:$0xf]
    %v1198 = vld [vmem:[#allocation8 + $0x7c] sm:$0xf]
    %v1199 = vld [vmem:[#allocation8 + $0x80] sm:$0xf]
    %v1200 = vld [vmem:[#allocation8 + $0x84] sm:$0xf]
    %v1201 = vld [vmem:[#allocation8 + $0x88] sm:$0xf]
    %v1202 = vld [vmem:[#allocation8 + $0x8c] sm:$0xf]
    %v1203 = vld [vmem:[#allocation8 + $0x90] sm:$0xf]
    %v1204 = vld [vmem:[#allocation8 + $0x94] sm:$0xf]
    %v1205 = vld [vmem:[#allocation8 + $0x98] sm:$0xf]
    %v1206 = vld [vmem:[#allocation8 + $0x9c] sm:$0xf]
    %v1207 = vld [vmem:[#allocation8 + $0xa0] sm:$0xf]
    %v1208 = vld [vmem:[#allocation8 + $0xa4] sm:$0xf]
    %v1209 = vld [vmem:[#allocation8 + $0xa8] sm:$0xf]
    %v1210 = vld [vmem:[#allocation8 + $0xac] sm:$0xf]
    %v1211 = vld [vmem:[#allocation8 + $0xb0] sm:$0xf]
    %v1212 = vld [vmem:[#allocation8 + $0xb4] sm:$0xf]
    %v1213 = vld [vmem:[#allocation8 + $0xb8] sm:$0xf]
    %v1214 = vld [vmem:[#allocation8 + $0xbc] sm:$0xf]
    %v1215 = vld [vmem:[#allocation8 + $0xc0] sm:$0xf]
    %v1216 = vld [vmem:[#allocation8 + $0xc4] sm:$0xf]
    %v1217 = vld [vmem:[#allocation8 + $0xc8] sm:$0xf]
    %v1218 = vld [vmem:[#allocation8 + $0xcc] sm:$0xf]
    %v1219 = vld [vmem:[#allocation8 + $0xd0] sm:$0xf]
    %v1220 = vld [vmem:[#allocation8 + $0xd4] sm:$0xf]
    %v1221 = vld [vmem:[#allocation8 + $0xd8] sm:$0xf]
    %v1222 = vld [vmem:[#allocation8 + $0xdc] sm:$0xf]
    %v1223 = vld [vmem:[#allocation8 + $0xe0] sm:$0xf]
    %v1224 = vld [vmem:[#allocation8 + $0xe4] sm:$0xf]
    %v1225 = vld [vmem:[#allocation8 + $0xe8] sm:$0xf]
    %v1226 = vld [vmem:[#allocation8 + $0xec] sm:$0xf]
    %v1227 = vld [vmem:[#allocation8 + $0xf0] sm:$0xf]
    %v1228 = vld [vmem:[#allocation8 + $0xf4] sm:$0xf]
    %v1229 = vld [vmem:[#allocation8 + $0xf8] sm:$0xf]
    %v1230 = vld [vmem:[#allocation8 + $0xfc] sm:$0xf]
    %v1231 = vld [vmem:[#allocation8 + $0x100] sm:$0xf]
    %v1232 = vld [vmem:[#allocation8 + $0x104] sm:$0xf]
    %v1233 = vld [vmem:[#allocation8 + $0x108] sm:$0xf]
    %v1234 = vld [vmem:[#allocation8 + $0x10c] sm:$0xf]
    %v1235 = vld [vmem:[#allocation8 + $0x110] sm:$0xf]
    %v1236 = vld [vmem:[#allocation8 + $0x114] sm:$0xf]
    %v1237 = vld [vmem:[#allocation8 + $0x118] sm:$0xf]
    %v1238 = vld [vmem:[#allocation8 + $0x11c] sm:$0xf]
    %v1239 = vld [vmem:[#allocation8 + $0x120] sm:$0xf]
    %v1240 = vld [vmem:[#allocation8 + $0x124] sm:$0xf]
    %v1241 = vld [vmem:[#allocation8 + $0x128] sm:$0xf]
    %v1242 = vld [vmem:[#allocation8 + $0x12c] sm:$0xf]
    %v1243 = vld [vmem:[#allocation8 + $0x130] sm:$0xf]
    %v1244 = vld [vmem:[#allocation8 + $0x134] sm:$0xf]
    %v1245 = vld [vmem:[#allocation8 + $0x138] sm:$0xf]
    %v1246 = vld [vmem:[#allocation8 + $0x13c] sm:$0xf]
    %v1247 = vld [vmem:[#allocation8 + $0x140] sm:$0xf]
    %v1248 = vld [vmem:[#allocation8 + $0x144] sm:$0xf]
    %v1249 = vld [vmem:[#allocation8 + $0x148] sm:$0xf]
    %v1250 = vld [vmem:[#allocation8 + $0x14c] sm:$0xf]
    %v1251 = vld [vmem:[#allocation8 + $0x150] sm:$0xf]
    %v1252 = vld [vmem:[#allocation8 + $0x154] sm:$0xf]
    %v1253 = vld [vmem:[#allocation8 + $0x158] sm:$0xf]
    %v1254 = vld [vmem:[#allocation8 + $0x15c] sm:$0xf]
    %v1255 = vld [vmem:[#allocation8 + $0x160] sm:$0xf]
    %v1256 = vld [vmem:[#allocation8 + $0x164] sm:$0xf]
    %v1257 = vld [vmem:[#allocation8 + $0x168] sm:$0xf]
    %v1258 = vld [vmem:[#allocation8 + $0x16c] sm:$0xf]
    %v1259 = vld [vmem:[#allocation8 + $0x170] sm:$0xf]
    %v1260 = vld [vmem:[#allocation8 + $0x174] sm:$0xf]
    %v1261 = vld [vmem:[#allocation8 + $0x178] sm:$0xf]
    %v1262 = vld [vmem:[#allocation8 + $0x17c] sm:$0xf]
    %v1263 = vld [vmem:[#allocation8 + $0x180] sm:$0xf]
    %v1264 = vld [vmem:[#allocation8 + $0x184] sm:$0xf]
    %v1265 = vld [vmem:[#allocation8 + $0x188] sm:$0xf]
    %v1266 = vld [vmem:[#allocation8 + $0x18c] sm:$0xf]
    %v1267 = vld [vmem:[#allocation8 + $0x190] sm:$0xf]
    %v1268 = vld [vmem:[#allocation8 + $0x194] sm:$0xf]
    %v1269 = vld [vmem:[#allocation8 + $0x198] sm:$0xf]
    %v1270 = vld [vmem:[#allocation8 + $0x19c] sm:$0xf]
    %v1271 = vld [vmem:[#allocation8 + $0x1a0] sm:$0xf]
    %v1272 = vld [vmem:[#allocation8 + $0x1a4] sm:$0xf]
    %v1273 = vld [vmem:[#allocation8 + $0x1a8] sm:$0xf]
    %v1274 = vld [vmem:[#allocation8 + $0x1ac] sm:$0xf]
    %v1275 = vld [vmem:[#allocation8 + $0x1b0] sm:$0xf]
    %v1276 = vld [vmem:[#allocation8 + $0x1b4] sm:$0xf]
    %v1277 = vld [vmem:[#allocation8 + $0x1b8] sm:$0xf]
    %v1278 = vld [vmem:[#allocation8 + $0x1bc] sm:$0xf]
    %v1279 = vld [vmem:[%s6] sm:$0x1]
    %v1281 = vlaneseq
    %v1282 = vshrl.u32 %v1281, 7
    %v1283 = vsub.s32 0, %v1282
    %v1284 = vrot.slane %v1279, %v1283
    %v1398 = vunpack.c.l.b16 %v1167
    %v1399 = vunpack.c.l.b16 %v1168
    %v1400 = vunpack.c.l.b16 %v1169
    %v1401 = vunpack.c.l.b16 %v1170
    %v1402 = vunpack.c.l.b16 %v1171
    %v1403 = vunpack.c.l.b16 %v1172
    %v1404 = vunpack.c.l.b16 %v1173
    %v1405 = vunpack.c.l.b16 %v1174
    %v1406 = vunpack.c.l.b16 %v1175
    %v1407 = vunpack.c.l.b16 %v1176
    %v1408 = vunpack.c.l.b16 %v1177
    %v1409 = vunpack.c.l.b16 %v1178
    %v1410 = vunpack.c.l.b16 %v1179
    %v1411 = vunpack.c.l.b16 %v1180
    %v1412 = vunpack.c.l.b16 %v1181
    %v1413 = vunpack.c.l.b16 %v1182
    %v1414 = vunpack.c.l.b16 %v1183
    %v1415 = vunpack.c.l.b16 %v1184
    %v1416 = vunpack.c.l.b16 %v1185
    %v1417 = vunpack.c.l.b16 %v1186
    %v1418 = vunpack.c.l.b16 %v1187
    %v1419 = vunpack.c.l.b16 %v1188
    %v1420 = vunpack.c.l.b16 %v1189
    %v1421 = vunpack.c.l.b16 %v1190
    %v1422 = vunpack.c.l.b16 %v1191
    %v1423 = vunpack.c.l.b16 %v1192
    %v1424 = vunpack.c.l.b16 %v1193
    %v1425 = vunpack.c.l.b16 %v1194
    %v1426 = vunpack.c.l.b16 %v1195
    %v1427 = vunpack.c.l.b16 %v1196
    %v1428 = vunpack.c.l.b16 %v1197
    %v1429 = vunpack.c.l.b16 %v1198
    %v1430 = vunpack.c.l.b16 %v1199
    %v1431 = vunpack.c.l.b16 %v1200
    %v1432 = vunpack.c.l.b16 %v1201
    %v1433 = vunpack.c.l.b16 %v1202
    %v1434 = vunpack.c.l.b16 %v1203
    %v1435 = vunpack.c.l.b16 %v1204
    %v1436 = vunpack.c.l.b16 %v1205
    %v1437 = vunpack.c.l.b16 %v1206
    %v1438 = vunpack.c.l.b16 %v1207
    %v1439 = vunpack.c.l.b16 %v1208
    %v1440 = vunpack.c.l.b16 %v1209
    %v1441 = vunpack.c.l.b16 %v1210
    %v1442 = vunpack.c.l.b16 %v1211
    %v1443 = vunpack.c.l.b16 %v1212
    %v1444 = vunpack.c.l.b16 %v1213
    %v1445 = vunpack.c.l.b16 %v1214
    %v1446 = vunpack.c.l.b16 %v1215
    %v1447 = vunpack.c.l.b16 %v1216
    %v1448 = vunpack.c.l.b16 %v1217
    %v1449 = vunpack.c.l.b16 %v1218
    %v1450 = vunpack.c.l.b16 %v1219
    %v1451 = vunpack.c.l.b16 %v1220
    %v1452 = vunpack.c.l.b16 %v1221
    %v1453 = vunpack.c.l.b16 %v1222
    %v1454 = vunpack.c.l.b16 %v1223
    %v1455 = vunpack.c.l.b16 %v1224
    %v1456 = vunpack.c.l.b16 %v1225
    %v1457 = vunpack.c.l.b16 %v1226
    %v1458 = vunpack.c.l.b16 %v1227
    %v1459 = vunpack.c.l.b16 %v1228
    %v1460 = vunpack.c.l.b16 %v1229
    %v1461 = vunpack.c.l.b16 %v1230
    %v1462 = vunpack.c.l.b16 %v1231
    %v1463 = vunpack.c.l.b16 %v1232
    %v1464 = vunpack.c.l.b16 %v1233
    %v1465 = vunpack.c.l.b16 %v1234
    %v1466 = vunpack.c.l.b16 %v1235
    %v1467 = vunpack.c.l.b16 %v1236
    %v1468 = vunpack.c.l.b16 %v1237
    %v1469 = vunpack.c.l.b16 %v1238
    %v1470 = vunpack.c.l.b16 %v1239
    %v1471 = vunpack.c.l.b16 %v1240
    %v1472 = vunpack.c.l.b16 %v1241
    %v1473 = vunpack.c.l.b16 %v1242
    %v1474 = vunpack.c.l.b16 %v1243
    %v1475 = vunpack.c.l.b16 %v1244
    %v1476 = vunpack.c.l.b16 %v1245
    %v1477 = vunpack.c.l.b16 %v1246
    %v1478 = vunpack.c.l.b16 %v1247
    %v1479 = vunpack.c.l.b16 %v1248
    %v1480 = vunpack.c.l.b16 %v1249
    %v1481 = vunpack.c.l.b16 %v1250
    %v1482 = vunpack.c.l.b16 %v1251
    %v1483 = vunpack.c.l.b16 %v1252
    %v1484 = vunpack.c.l.b16 %v1253
    %v1485 = vunpack.c.l.b16 %v1254
    %v1486 = vunpack.c.l.b16 %v1255
    %v1487 = vunpack.c.l.b16 %v1256
    %v1488 = vunpack.c.l.b16 %v1257
    %v1489 = vunpack.c.l.b16 %v1258
    %v1490 = vunpack.c.l.b16 %v1259
    %v1491 = vunpack.c.l.b16 %v1260
    %v1492 = vunpack.c.l.b16 %v1261
    %v1493 = vunpack.c.l.b16 %v1262
    %v1494 = vunpack.c.l.b16 %v1263
    %v1495 = vunpack.c.l.b16 %v1264
    %v1496 = vunpack.c.l.b16 %v1265
    %v1497 = vunpack.c.l.b16 %v1266
    %v1498 = vunpack.c.l.b16 %v1267
    %v1499 = vunpack.c.l.b16 %v1268
    %v1500 = vunpack.c.l.b16 %v1269
    %v1501 = vunpack.c.l.b16 %v1270
    %v1502 = vunpack.c.l.b16 %v1271
    %v1503 = vunpack.c.l.b16 %v1272
    %v1504 = vunpack.c.l.b16 %v1273
    %v1505 = vunpack.c.l.b16 %v1274
    %v1506 = vunpack.c.l.b16 %v1275
    %v1507 = vunpack.c.l.b16 %v1276
    %v1508 = vunpack.c.l.b16 %v1277
    %v1509 = vunpack.c.l.b16 %v1278
    %v1510 = vpack.c.b16 %v1399, %v1398
    %v1511 = vpack.c.b16 %v1401, %v1400
    %v1512 = vpack.c.b16 %v1403, %v1402
    %v1513 = vpack.c.b16 %v1405, %v1404
    %v1514 = vpack.c.b16 %v1407, %v1406
    %v1515 = vpack.c.b16 %v1409, %v1408
    %v1516 = vpack.c.b16 %v1411, %v1410
    %v1517 = vpack.c.b16 %v1413, %v1412
    %v1518 = vpack.c.b16 %v1415, %v1414
    %v1519 = vpack.c.b16 %v1417, %v1416
    %v1520 = vpack.c.b16 %v1419, %v1418
    %v1521 = vpack.c.b16 %v1421, %v1420
    %v1522 = vpack.c.b16 %v1423, %v1422
    %v1523 = vpack.c.b16 %v1425, %v1424
    %v1524 = vpack.c.b16 %v1427, %v1426
    %v1525 = vpack.c.b16 %v1429, %v1428
    %v1526 = vpack.c.b16 %v1431, %v1430
    %v1527 = vpack.c.b16 %v1433, %v1432
    %v1528 = vpack.c.b16 %v1435, %v1434
    %v1529 = vpack.c.b16 %v1437, %v1436
    %v1530 = vpack.c.b16 %v1439, %v1438
    %v1531 = vpack.c.b16 %v1441, %v1440
    %v1532 = vpack.c.b16 %v1443, %v1442
    %v1533 = vpack.c.b16 %v1445, %v1444
    %v1534 = vpack.c.b16 %v1447, %v1446
    %v1535 = vpack.c.b16 %v1449, %v1448
    %v1536 = vpack.c.b16 %v1451, %v1450
    %v1537 = vpack.c.b16 %v1453, %v1452
    %v1538 = vpack.c.b16 %v1455, %v1454
    %v1539 = vpack.c.b16 %v1457, %v1456
    %v1540 = vpack.c.b16 %v1459, %v1458
    %v1541 = vpack.c.b16 %v1461, %v1460
    %v1542 = vpack.c.b16 %v1463, %v1462
    %v1543 = vpack.c.b16 %v1465, %v1464
    %v1544 = vpack.c.b16 %v1467, %v1466
    %v1545 = vpack.c.b16 %v1469, %v1468
    %v1546 = vpack.c.b16 %v1471, %v1470
    %v1547 = vpack.c.b16 %v1473, %v1472
    %v1548 = vpack.c.b16 %v1475, %v1474
    %v1549 = vpack.c.b16 %v1477, %v1476
    %v1550 = vpack.c.b16 %v1479, %v1478
    %v1551 = vpack.c.b16 %v1481, %v1480
    %v1552 = vpack.c.b16 %v1483, %v1482
    %v1553 = vpack.c.b16 %v1485, %v1484
    %v1554 = vpack.c.b16 %v1487, %v1486
    %v1555 = vpack.c.b16 %v1489, %v1488
    %v1556 = vpack.c.b16 %v1491, %v1490
    %v1557 = vpack.c.b16 %v1493, %v1492
    %v1558 = vpack.c.b16 %v1495, %v1494
    %v1559 = vpack.c.b16 %v1497, %v1496
    %v1560 = vpack.c.b16 %v1499, %v1498
    %v1561 = vpack.c.b16 %v1501, %v1500
    %v1562 = vpack.c.b16 %v1503, %v1502
    %v1563 = vpack.c.b16 %v1505, %v1504
    %v1564 = vpack.c.b16 %v1507, %v1506
    %v1565 = vpack.c.b16 %v1509, %v1508
    %1622 = vmatprep.subr.bf16.mxu0 0
    %1623 = vmatpush1.bf16.msra.mxu0 %v1510
    %1624 = vmatprep.subr.bf16.mxu0 0
    %1625 = vmatpush1.bf16.msra.mxu0 %v1511
    %1626 = vmatprep.subr.bf16.mxu0 0
    %1627 = vmatpush1.bf16.msra.mxu0 %v1512
    %1628 = vmatprep.subr.bf16.mxu0 0
    %1629 = vmatpush1.bf16.msra.mxu0 %v1513
    %1630 = vmatprep.subr.bf16.mxu0 0
    %1631 = vmatpush1.bf16.msra.mxu0 %v1514
    %1632 = vmatprep.subr.bf16.mxu0 0
    %1633 = vmatpush1.bf16.msra.mxu0 %v1515
    %1634 = vmatprep.subr.bf16.mxu0 0
    %1635 = vmatpush1.bf16.msra.mxu0 %v1516
    %1636 = vmatprep.subr.bf16.mxu0 0
    %1637 = vmatpush1.bf16.msra.mxu0 %v1517
    %1638 = vmatprep.subr.bf16.mxu0 0
    %1639 = vmatpush1.bf16.msra.mxu0 %v1518
    %1640 = vmatprep.subr.bf16.mxu0 0
    %1641 = vmatpush1.bf16.msra.mxu0 %v1519
    %1642 = vmatprep.subr.bf16.mxu0 0
    %1643 = vmatpush1.bf16.msra.mxu0 %v1520
    %1644 = vmatprep.subr.bf16.mxu0 0
    %1645 = vmatpush1.bf16.msra.mxu0 %v1521
    %1646 = vmatprep.subr.bf16.mxu0 0
    %1647 = vmatpush1.bf16.msra.mxu0 %v1522
    %1648 = vmatprep.subr.bf16.mxu0 0
    %1649 = vmatpush1.bf16.msra.mxu0 %v1523
    %1650 = vmatprep.subr.bf16.mxu0 0
    %1651 = vmatpush1.bf16.msra.mxu0 %v1524
    %1652 = vmatprep.subr.bf16.mxu0 0
    %1653 = vmatpush1.bf16.msra.mxu0 %v1525
    %1654 = vmatprep.mubr.bf16.mxu0 %v1154
    %1655 = vmatmul.mubr.bf16.gmra.mrb[0].mxu0 %v1153
    %v1656 = vpop.f32.mrb[0].mxu0
    %v1657 = vadd.f32 %v1284, %v1656
    %v1658 = vpop.f32.mrb[0].mxu0
    %v1659 = vpop.f32.mrb[0].mxu0
    %v1660 = vadd.f32 %v1284, %v1659
    %v1661 = vpop.f32.mrb[0].mxu0
    %1662 = vmatprep.mubr.bf16.mxu0 %v1161
    %1663 = vmatmul.mubr.bf16.gmra.mrb[0].mxu0 %v1160
    %v1664 = vpop.f32.mrb[0].mxu0
    %v1665 = vadd.f32 %v1284, %v1664
    %v1666 = vpop.f32.mrb[0].mxu0
    %v1667 = vpop.f32.mrb[0].mxu0
    %v1668 = vadd.f32 %v1284, %v1667
    %v1669 = vpop.f32.mrb[0].mxu0
    %1670 = vdwg.mxu0
    %1671 = vmatprep.subr.bf16.mxu0 0
    %1672 = vmatpush1.bf16.msra.mxu0 %v1526
    %1673 = vmatprep.subr.bf16.mxu0 0
    %1674 = vmatpush1.bf16.msra.mxu0 %v1527
    %1675 = vmatprep.subr.bf16.mxu0 0
    %1676 = vmatpush1.bf16.msra.mxu0 %v1528
    %1677 = vmatprep.subr.bf16.mxu0 0
    %1678 = vmatpush1.bf16.msra.mxu0 %v1529
    %1679 = vmatprep.subr.bf16.mxu0 0
    %1680 = vmatpush1.bf16.msra.mxu0 %v1530
    %1681 = vmatprep.subr.bf16.mxu0 0
    %1682 = vmatpush1.bf16.msra.mxu0 %v1531
    %1683 = vmatprep.subr.bf16.mxu0 0
    %1684 = vmatpush1.bf16.msra.mxu0 %v1532
    %1685 = vmatprep.subr.bf16.mxu0 0
    %1686 = vmatpush1.bf16.msra.mxu0 %v1533
    %1687 = vmatprep.subr.bf16.mxu0 0
    %1688 = vmatpush1.bf16.msra.mxu0 %v1534
    %1689 = vmatprep.subr.bf16.mxu0 0
    %1690 = vmatpush1.bf16.msra.mxu0 %v1535
    %1691 = vmatprep.subr.bf16.mxu0 0
    %1692 = vmatpush1.bf16.msra.mxu0 %v1536
    %1693 = vmatprep.subr.bf16.mxu0 0
    %1694 = vmatpush1.bf16.msra.mxu0 %v1537
    %1695 = vmatprep.subr.bf16.mxu0 0
    %1696 = vmatpush1.bf16.msra.mxu0 %v1538
    %1697 = vmatprep.subr.bf16.mxu0 0
    %1698 = vmatpush1.bf16.msra.mxu0 %v1539
    %1699 = vmatprep.subr.bf16.mxu0 0
    %1700 = vmatpush1.bf16.msra.mxu0 %v1540
    %1701 = vmatprep.subr.bf16.mxu0 0
    %1702 = vmatpush1.bf16.msra.mxu0 %v1541
    %1703 = vmatprep.mubr.bf16.mxu0 %v1156
    %1704 = vmatmul.mubr.bf16.gmra.mrb[0].mxu0 %v1155
    %v1705 = vpop.f32.mrb[0].mxu0
    %v1706 = vadd.f32 %v1657, %v1705
    %v1707 = vpop.f32.mrb[0].mxu0
    %v1708 = vpop.f32.mrb[0].mxu0
    %v1709 = vadd.f32 %v1660, %v1708
    %v1710 = vpop.f32.mrb[0].mxu0
    %1711 = vmatprep.mubr.bf16.mxu0 %v1163
    %1712 = vmatmul.mubr.bf16.gmra.mrb[0].mxu0 %v1162
    %v1713 = vpop.f32.mrb[0].mxu0
    %v1714 = vadd.f32 %v1665, %v1713
    %v1715 = vpop.f32.mrb[0].mxu0
    %v1716 = vpop.f32.mrb[0].mxu0
    %v1717 = vadd.f32 %v1668, %v1716
    %v1718 = vpop.f32.mrb[0].mxu0
    %1719 = vdwg.mxu0
    %1720 = vmatprep.subr.bf16.mxu0 0
    %1721 = vmatpush1.bf16.msra.mxu0 %v1542
    %1722 = vmatprep.subr.bf16.mxu0 0
    %1723 = vmatpush1.bf16.msra.mxu0 %v1543
    %1724 = vmatprep.subr.bf16.mxu0 0
    %1725 = vmatpush1.bf16.msra.mxu0 %v1544
    %1726 = vmatprep.subr.bf16.mxu0 0
    %1727 = vmatpush1.bf16.msra.mxu0 %v1545
    %1728 = vmatprep.subr.bf16.mxu0 0
    %1729 = vmatpush1.bf16.msra.mxu0 %v1546
    %1730 = vmatprep.subr.bf16.mxu0 0
    %1731 = vmatpush1.bf16.msra.mxu0 %v1547
    %1732 = vmatprep.subr.bf16.mxu0 0
    %1733 = vmatpush1.bf16.msra.mxu0 %v1548
    %1734 = vmatprep.subr.bf16.mxu0 0
    %1735 = vmatpush1.bf16.msra.mxu0 %v1549
    %1736 = vmatprep.subr.bf16.mxu0 0
    %1737 = vmatpush1.bf16.msra.mxu0 %v1550
    %1738 = vmatprep.subr.bf16.mxu0 0
    %1739 = vmatpush1.bf16.msra.mxu0 %v1551
    %1740 = vmatprep.subr.bf16.mxu0 0
    %1741 = vmatpush1.bf16.msra.mxu0 %v1552
    %1742 = vmatprep.subr.bf16.mxu0 0
    %1743 = vmatpush1.bf16.msra.mxu0 %v1553
    %1744 = vmatprep.subr.bf16.mxu0 0
    %1745 = vmatpush1.bf16.msra.mxu0 %v1554
    %1746 = vmatprep.subr.bf16.mxu0 0
    %1747 = vmatpush1.bf16.msra.mxu0 %v1555
    %1748 = vmatprep.subr.bf16.mxu0 0
    %1749 = vmatpush1.bf16.msra.mxu0 %v1556
    %1750 = vmatprep.subr.bf16.mxu0 0
    %1751 = vmatpush1.bf16.msra.mxu0 %v1557
    %1752 = vmatprep.mubr.bf16.mxu0 %v1158
    %1753 = vmatmul.mubr.bf16.gmra.mrb[0].mxu0 %v1157
    %v1754 = vpop.f32.mrb[0].mxu0
    %v1755 = vadd.f32 %v1706, %v1754
    %v1756 = vpop.f32.mrb[0].mxu0
    %v1757 = vpop.f32.mrb[0].mxu0
    %v1758 = vadd.f32 %v1709, %v1757
    %v1759 = vpop.f32.mrb[0].mxu0
    %1760 = vmatprep.mubr.bf16.mxu0 %v1165
    %1761 = vmatmul.mubr.bf16.gmra.mrb[0].mxu0 %v1164
    %v1762 = vpop.f32.mrb[0].mxu0
    %v1763 = vadd.f32 %v1714, %v1762
    %v1764 = vpop.f32.mrb[0].mxu0
    %v1765 = vpop.f32.mrb[0].mxu0
    %v1766 = vadd.f32 %v1717, %v1765
    %v1767 = vpop.f32.mrb[0].mxu0
    %1768 = vdwg.mxu0
    %1769 = vmatprep.subr.bf16.mxu0 0
    %1770 = vmatpush1.bf16.msra.mxu0 %v1558
    %1771 = vmatprep.subr.bf16.mxu0 0
    %1772 = vmatpush1.bf16.msra.mxu0 %v1559
    %1773 = vmatprep.subr.bf16.mxu0 0
    %1774 = vmatpush1.bf16.msra.mxu0 %v1560
    %1775 = vmatprep.subr.bf16.mxu0 0
    %1776 = vmatpush1.bf16.msra.mxu0 %v1561
    %1777 = vmatprep.subr.bf16.mxu0 0
    %1778 = vmatpush1.bf16.msra.mxu0 %v1562
    %1779 = vmatprep.subr.bf16.mxu0 0
    %1780 = vmatpush1.bf16.msra.mxu0 %v1563
    %1781 = vmatprep.subr.bf16.mxu0 0
    %1782 = vmatpush1.bf16.msra.mxu0 %v1564
    %1783 = vmatprep.subr.bf16.mxu0 0
    %1784 = vmatpush1.bf16.msra.mxu0 %v1565
    %1785 = vmatprep.subr.bf16.mxu0 0
    %1786 = vmatpush1.bf16.msra.mxu0 0
    %1787 = vmatprep.subr.bf16.mxu0 0
    %1788 = vmatpush1.bf16.msra.mxu0 0
    %1789 = vmatprep.subr.bf16.mxu0 0
    %1790 = vmatpush1.bf16.msra.mxu0 0
    %1791 = vmatprep.subr.bf16.mxu0 0
    %1792 = vmatpush1.bf16.msra.mxu0 0
    %1793 = vmatprep.subr.bf16.mxu0 0
    %1794 = vmatpush1.bf16.msra.mxu0 0
    %1795 = vmatprep.subr.bf16.mxu0 0
    %1796 = vmatpush1.bf16.msra.mxu0 0
    %1797 = vmatprep.subr.bf16.mxu0 0
    %1798 = vmatpush1.bf16.msra.mxu0 0
    %1799 = vmatprep.subr.bf16.mxu0 0
    %1800 = vmatpush1.bf16.msra.mxu0 0
    %1801 = vmatprep.mubr.bf16.mxu0 0
    %1802 = vmatmul.mubr.bf16.gmra.mrb[0].mxu0 %v1159
    %v1803 = vpop.f32.mrb[0].mxu0
    %v1804 = vadd.f32 %v1755, %v1803
    %v1805 = vpop.f32.mrb[0].mxu0
    %v1806 = vpop.f32.mrb[0].mxu0
    %v1807 = vadd.f32 %v1758, %v1806
    %v1808 = vpop.f32.mrb[0].mxu0
    %1809 = vmatprep.mubr.bf16.mxu0 0
    %1810 = vmatmul.mubr.bf16.gmra.mrb[0].mxu0 %v1166
    %v1811 = vpop.f32.mrb[0].mxu0
    %v1812 = vadd.f32 %v1763, %v1811
    %v1813 = vpop.f32.mrb[0].mxu0
    %v1814 = vpop.f32.mrb[0].mxu0
    %v1815 = vadd.f32 %v1766, %v1814
    %v1816 = vpop.f32.mrb[0].mxu0
    %1817 = vdwg.mxu0
    %v1818 = vadd.f32 %v1804, %v1807
    %v1819 = vadd.f32 %v1818, %v1812
    %v1820 = vadd.f32 %v1819, %v1815
    %v1821 = vrot.slane %v1820, 4
    %v1822 = vadd.f32 %v1820, %v1821
    %v1823 = vrot.slane %v1822, 2
    %v1824 = vadd.f32 %v1822, %v1823
    %v1825 = vrot.slane %v1824, 1
    %v1826 = vadd.f32 %v1824, %v1825
    %v1827 = vmul.f32 %v1826, 0.03125
    %v1828 = vmul.f32 %v1804, %v1804
    %v1829 = vmul.f32 %v1807, %v1807
    %v1830 = vmul.f32 %v1812, %v1812
    %v1831 = vmul.f32 %v1815, %v1815
    %v1832 = vadd.f32 %v1828, %v1829
    %v1833 = vadd.f32 %v1832, %v1830
    %v1834 = vadd.f32 %v1833, %v1831
    %v1835 = vrot.slane %v1834, 4
    %v1836 = vadd.f32 %v1834, %v1835
    %v1837 = vrot.slane %v1836, 2
    %v1838 = vadd.f32 %v1836, %v1837
    %v1839 = vrot.slane %v1838, 1
    %v1840 = vadd.f32 %v1838, %v1839
    %v1841 = vmul.f32 %v1840, 0.03125
    %v1842 = vmul.f32 %v1827, %v1827
    %v1843 = vsub.f32 %v1841, %v1842
    %v1844 = vsub.f32 %v1804, %v1827
    %v1845 = vsub.f32 %v1807, %v1827
    %v1846 = vsub.f32 %v1812, %v1827
    %v1847 = vsub.f32 %v1815, %v1827
    %v1848 = vadd.f32 %v1843, 1e-05
    %v1849 = vrsqrt.pop %v1848
    %v1850 = vmul.f32 %v1844, %v1849
    %v1851 = vmul.f32 %v1845, %v1849
    %v1852 = vmul.f32 %v1846, %v1849
    %v1853 = vmul.f32 %v1847, %v1849
    %v1854 = vld [vmem:[%s7] sm:$0x1]
    %v1856 = vlaneseq
    %v1857 = vshrl.u32 %v1856, 7
    %v1858 = vsub.s32 0, %v1857
    %v1859 = vrot.slane %v1854, %v1858
    %v1861 = vmul.f32 %v1850, %v1859
    %v1862 = vmul.f32 %v1851, %v1859
    %v1863 = vmul.f32 %v1852, %v1859
    %v1864 = vmul.f32 %v1853, %v1859
    %v1865 = vld [vmem:[%s8] sm:$0x1]
    %v1867 = vlaneseq
    %v1868 = vshrl.u32 %v1867, 7
    %v1869 = vsub.s32 0, %v1868
    %v1870 = vrot.slane %v1865, %v1869
    %v1872 = vadd.f32 %v1861, %v1870
    %v1873 = vadd.f32 %v1862, %v1870
    %v1874 = vadd.f32 %v1863, %v1870
    %v1875 = vadd.f32 %v1864, %v1870
    %v1876 = vmax.f32 %v1872, 0.0
    %v1877 = vmax.f32 %v1873, 0.0
    %v1878 = vmax.f32 %v1874, 0.0
    %v1879 = vmax.f32 %v1875, 0.0
    %1880 = vst [vmem:[#allocation2] sm:$0xff] 0.0
    %1881 = vst [vmem:[#allocation2 + $0x8] sm:$0xff] 0.0
    %1882 = vst [vmem:[#allocation2 + $0x10] sm:$0xff] 0.0
    %1883 = vst [vmem:[#allocation2 + $0x18] sm:$0xff] 0.0
    %1884 = vst [vmem:[#allocation2 + $0x20] sm:$0xff] 0.0
    %1885 = vst [vmem:[#allocation2 + $0x28] sm:$0xff] 0.0
    %1886 = vst [vmem:[#allocation2 + $0x30] sm:$0xff] 0.0
    %1887 = vst [vmem:[#allocation2 + $0x38] sm:$0xff] 0.0
    %1888 = vst [vmem:[#allocation2 + $0x40] sm:$0xff] 0.0
    %1889 = vst [vmem:[#allocation2 + $0x48] sm:$0xff] 0.0
    %1890 = vst [vmem:[#allocation2 + $0x50] sm:$0xff] 0.0
    %1891 = vst [vmem:[#allocation2 + $0x58] sm:$0xff] 0.0
    %1892 = vst [vmem:[#allocation2 + $0x60] sm:$0xff] 0.0
    %1893 = vst [vmem:[#allocation2 + $0x68] sm:$0xff] 0.0
    %1894 = vst [vmem:[#allocation2 + $0x70] sm:$0xff] 0.0
    %1895 = vst [vmem:[#allocation2 + $0x78] sm:$0xff] 0.0
    %1896 = vst [vmem:[#allocation2 + $0x80] sm:$0xff] 0.0
    %1897 = vst [vmem:[#allocation2 + $0x88] sm:$0xff] 0.0
    %1898 = vst [vmem:[#allocation2 + $0x90] sm:$0xff] 0.0
    %1899 = vst [vmem:[#allocation2 + $0x98] sm:$0xff] 0.0
    %1900 = vst [vmem:[#allocation2 + $0xa0] sm:$0xff] 0.0
    %1901 = vst [vmem:[#allocation2 + $0xa8] sm:$0xff] 0.0
    %1902 = vst [vmem:[#allocation2 + $0xb0] sm:$0xff] 0.0
    %1903 = vst [vmem:[#allocation2 + $0xb8] sm:$0xff] 0.0
    %1904 = vst [vmem:[#allocation2 + $0xc0] sm:$0xff] 0.0
    %1905 = vst [vmem:[#allocation2 + $0xc8] sm:$0xff] 0.0
    %1906 = vst [vmem:[#allocation2 + $0xd0] sm:$0xff] 0.0
    %1907 = vst [vmem:[#allocation2 + $0xd8] sm:$0xff] 0.0
    %1908 = vst [vmem:[#allocation2] sm:$0xff] %v1876
    %1909 = vst [vmem:[#allocation2 + $0x38] sm:$0xff] %v1877
    %1910 = vst [vmem:[#allocation2 + $0x70] sm:$0xff] %v1878
    %1911 = vst [vmem:[#allocation2 + $0xa8] sm:$0xff] %v1879
    %v1916 = vrot.slane %v1876, 1
    %v1917 = vrot.slane %v1877, 1
    %v1918 = vsel %vm205, %v1916, %v1917
    %v1919 = vrot.slane %v1878, 1
    %v1920 = vrot.slane %v1879, 1
    %v1921 = vsel %vm205, %v1919, %v1920
    %1926 = vst [vmem:[#allocation2 + $0x8] sm:$0xff] %v1918
    %1927 = vst [vmem:[#allocation2 + $0x40] sm:$0x7f] %v1917
    %1928 = vst [vmem:[#allocation2 + $0x78] sm:$0xff] %v1921
    %1929 = vst [vmem:[#allocation2 + $0xb0] sm:$0x7f] %v1920
    %v1930 = vld [vmem:[#allocation2] sm:$0xff]
    %v1931 = vld [vmem:[#allocation2 + $0x8] sm:$0xff]
    %v1932 = vld [vmem:[#allocation2 + $0x38] sm:$0xff]
    %v1933 = vld [vmem:[#allocation2 + $0x40] sm:$0xff]
    %v1934 = vld [vmem:[#allocation2 + $0x70] sm:$0xff]
    %v1935 = vld [vmem:[#allocation2 + $0x78] sm:$0xff]
    %v1936 = vld [vmem:[#allocation2 + $0xa8] sm:$0xff]
    %v1937 = vld [vmem:[#allocation2 + $0xb0] sm:$0xff]
    %v1938 = vpack.c.bf16 %v1932, %v1930
    %v1939 = vpack.c.bf16 %v1933, %v1931
    %v1940 = vpack.c.bf16 %v1936, %v1934
    %v1941 = vpack.c.bf16 %v1937, %v1935
    %v1942 = vld [vmem:[#allocation9] sm:$0xf]
    %v1943 = vld [vmem:[#allocation9 + $0x4] sm:$0xf]
    %v1944 = vld [vmem:[#allocation9 + $0x8] sm:$0xf]
    %v1945 = vld [vmem:[#allocation9 + $0xc] sm:$0xf]
    %v1946 = vld [vmem:[#allocation9 + $0x10] sm:$0xf]
    %v1947 = vld [vmem:[#allocation9 + $0x14] sm:$0xf]
    %v1948 = vld [vmem:[#allocation9 + $0x18] sm:$0xf]
    %v1949 = vld [vmem:[#allocation9 + $0x1c] sm:$0xf]
    %v1950 = vld [vmem:[#allocation9 + $0x20] sm:$0xf]
    %v1951 = vld [vmem:[#allocation9 + $0x24] sm:$0xf]
    %v1952 = vld [vmem:[#allocation9 + $0x28] sm:$0xf]
    %v1953 = vld [vmem:[#allocation9 + $0x2c] sm:$0xf]
    %v1954 = vld [vmem:[#allocation9 + $0x30] sm:$0xf]
    %v1955 = vld [vmem:[#allocation9 + $0x34] sm:$0xf]
    %v1956 = vld [vmem:[#allocation9 + $0x38] sm:$0xf]
    %v1957 = vld [vmem:[#allocation9 + $0x3c] sm:$0xf]
    %v1958 = vld [vmem:[#allocation9 + $0x40] sm:$0xf]
    %v1959 = vld [vmem:[#allocation9 + $0x44] sm:$0xf]
    %v1960 = vld [vmem:[#allocation9 + $0x48] sm:$0xf]
    %v1961 = vld [vmem:[#allocation9 + $0x4c] sm:$0xf]
    %v1962 = vld [vmem:[#allocation9 + $0x50] sm:$0xf]
    %v1963 = vld [vmem:[#allocation9 + $0x54] sm:$0xf]
    %v1964 = vld [vmem:[#allocation9 + $0x58] sm:$0xf]
    %v1965 = vld [vmem:[#allocation9 + $0x5c] sm:$0xf]
    %v1966 = vld [vmem:[#allocation9 + $0x60] sm:$0xf]
    %v1967 = vld [vmem:[#allocation9 + $0x64] sm:$0xf]
    %v1968 = vld [vmem:[#allocation9 + $0x68] sm:$0xf]
    %v1969 = vld [vmem:[#allocation9 + $0x6c] sm:$0xf]
    %v1970 = vld [vmem:[#allocation9 + $0x70] sm:$0xf]
    %v1971 = vld [vmem:[#allocation9 + $0x74] sm:$0xf]
    %v1972 = vld [vmem:[#allocation9 + $0x78] sm:$0xf]
    %v1973 = vld [vmem:[#allocation9 + $0x7c] sm:$0xf]
    %v1974 = vld [vmem:[%s10] sm:$0x1]
    %v1976 = vlaneseq
    %v1977 = vshrl.u32 %v1976, 7
    %v1978 = vsub.s32 0, %v1977
    %v1979 = vrot.slane %v1974, %v1978
    %v2013 = vunpack.c.l.b16 %v1942
    %v2014 = vunpack.c.l.b16 %v1943
    %v2015 = vunpack.c.l.b16 %v1944
    %v2016 = vunpack.c.l.b16 %v1945
    %v2017 = vunpack.c.l.b16 %v1946
    %v2018 = vunpack.c.l.b16 %v1947
    %v2019 = vunpack.c.l.b16 %v1948
    %v2020 = vunpack.c.l.b16 %v1949
    %v2021 = vunpack.c.l.b16 %v1950
    %v2022 = vunpack.c.l.b16 %v1951
    %v2023 = vunpack.c.l.b16 %v1952
    %v2024 = vunpack.c.l.b16 %v1953
    %v2025 = vunpack.c.l.b16 %v1954
    %v2026 = vunpack.c.l.b16 %v1955
    %v2027 = vunpack.c.l.b16 %v1956
    %v2028 = vunpack.c.l.b16 %v1957
    %v2029 = vunpack.c.l.b16 %v1958
    %v2030 = vunpack.c.l.b16 %v1959
    %v2031 = vunpack.c.l.b16 %v1960
    %v2032 = vunpack.c.l.b16 %v1961
    %v2033 = vunpack.c.l.b16 %v1962
    %v2034 = vunpack.c.l.b16 %v1963
    %v2035 = vunpack.c.l.b16 %v1964
    %v2036 = vunpack.c.l.b16 %v1965
    %v2037 = vunpack.c.l.b16 %v1966
    %v2038 = vunpack.c.l.b16 %v1967
    %v2039 = vunpack.c.l.b16 %v1968
    %v2040 = vunpack.c.l.b16 %v1969
    %v2041 = vunpack.c.l.b16 %v1970
    %v2042 = vunpack.c.l.b16 %v1971
    %v2043 = vunpack.c.l.b16 %v1972
    %v2044 = vunpack.c.l.b16 %v1973
    %v2045 = vpack.c.b16 %v2014, %v2013
    %v2046 = vpack.c.b16 %v2016, %v2015
    %v2047 = vpack.c.b16 %v2018, %v2017
    %v2048 = vpack.c.b16 %v2020, %v2019
    %v2049 = vpack.c.b16 %v2022, %v2021
    %v2050 = vpack.c.b16 %v2024, %v2023
    %v2051 = vpack.c.b16 %v2026, %v2025
    %v2052 = vpack.c.b16 %v2028, %v2027
    %v2053 = vpack.c.b16 %v2030, %v2029
    %v2054 = vpack.c.b16 %v2032, %v2031
    %v2055 = vpack.c.b16 %v2034, %v2033
    %v2056 = vpack.c.b16 %v2036, %v2035
    %v2057 = vpack.c.b16 %v2038, %v2037
    %v2058 = vpack.c.b16 %v2040, %v2039
    %v2059 = vpack.c.b16 %v2042, %v2041
    %v2060 = vpack.c.b16 %v2044, %v2043
    %2077 = vmatprep.subr.bf16.mxu0 0
    %2078 = vmatpush1.bf16.msra.mxu0 %v2045
    %2079 = vmatprep.subr.bf16.mxu0 0
    %2080 = vmatpush1.bf16.msra.mxu0 %v2046
    %2081 = vmatprep.subr.bf16.mxu0 0
    %2082 = vmatpush1.bf16.msra.mxu0 %v2047
    %2083 = vmatprep.subr.bf16.mxu0 0
    %2084 = vmatpush1.bf16.msra.mxu0 %v2048
    %2085 = vmatprep.subr.bf16.mxu0 0
    %2086 = vmatpush1.bf16.msra.mxu0 %v2049
    %2087 = vmatprep.subr.bf16.mxu0 0
    %2088 = vmatpush1.bf16.msra.mxu0 %v2050
    %2089 = vmatprep.subr.bf16.mxu0 0
    %2090 = vmatpush1.bf16.msra.mxu0 %v2051
    %2091 = vmatprep.subr.bf16.mxu0 0
    %2092 = vmatpush1.bf16.msra.mxu0 %v2052
    %2093 = vmatprep.subr.bf16.mxu0 0
    %2094 = vmatpush1.bf16.msra.mxu0 %v2053
    %2095 = vmatprep.subr.bf16.mxu0 0
    %2096 = vmatpush1.bf16.msra.mxu0 %v2054
    %2097 = vmatprep.subr.bf16.mxu0 0
    %2098 = vmatpush1.bf16.msra.mxu0 %v2055
    %2099 = vmatprep.subr.bf16.mxu0 0
    %2100 = vmatpush1.bf16.msra.mxu0 %v2056
    %2101 = vmatprep.subr.bf16.mxu0 0
    %2102 = vmatpush1.bf16.msra.mxu0 %v2057
    %2103 = vmatprep.subr.bf16.mxu0 0
    %2104 = vmatpush1.bf16.msra.mxu0 %v2058
    %2105 = vmatprep.subr.bf16.mxu0 0
    %2106 = vmatpush1.bf16.msra.mxu0 %v2059
    %2107 = vmatprep.subr.bf16.mxu0 0
    %2108 = vmatpush1.bf16.msra.mxu0 %v2060
    %2109 = vmatprep.mubr.bf16.mxu0 %v1939
    %2110 = vmatmul.mubr.bf16.gmra.mrb[0].mxu0 %v1938
    %v2111 = vpop.f32.mrb[0].mxu0
    %v2112 = vadd.f32 %v1979, %v2111
    %v2113 = vpop.f32.mrb[0].mxu0
    %v2114 = vpop.f32.mrb[0].mxu0
    %v2115 = vadd.f32 %v1979, %v2114
    %v2116 = vpop.f32.mrb[0].mxu0
    %2117 = vmatprep.mubr.bf16.mxu0 %v1941
    %2118 = vmatmul.mubr.bf16.gmra.mrb[0].mxu0 %v1940
    %v2119 = vpop.f32.mrb[0].mxu0
    %v2120 = vadd.f32 %v1979, %v2119
    %v2121 = vpop.f32.mrb[0].mxu0
    %v2122 = vpop.f32.mrb[0].mxu0
    %v2123 = vadd.f32 %v1979, %v2122
    %v2124 = vpop.f32.mrb[0].mxu0
    %2125 = vdwg.mxu0
    %v2126 = vadd.f32 %v2112, %v2115
    %v2127 = vadd.f32 %v2126, %v2120
    %v2128 = vadd.f32 %v2127, %v2123
    %v2129 = vrot.slane %v2128, 4
    %v2130 = vadd.f32 %v2128, %v2129
    %v2131 = vrot.slane %v2130, 2
    %v2132 = vadd.f32 %v2130, %v2131
    %v2133 = vrot.slane %v2132, 1
    %v2134 = vadd.f32 %v2132, %v2133
    %v2135 = vmul.f32 %v2134, 0.03125
    %v2136 = vmul.f32 %v2112, %v2112
    %v2137 = vmul.f32 %v2115, %v2115
    %v2138 = vmul.f32 %v2120, %v2120
    %v2139 = vmul.f32 %v2123, %v2123
    %v2140 = vadd.f32 %v2136, %v2137
    %v2141 = vadd.f32 %v2140, %v2138
    %v2142 = vadd.f32 %v2141, %v2139
    %v2143 = vrot.slane %v2142, 4
    %v2144 = vadd.f32 %v2142, %v2143
    %v2145 = vrot.slane %v2144, 2
    %v2146 = vadd.f32 %v2144, %v2145
    %v2147 = vrot.slane %v2146, 1
    %v2148 = vadd.f32 %v2146, %v2147
    %v2149 = vmul.f32 %v2148, 0.03125
    %v2150 = vmul.f32 %v2135, %v2135
    %v2151 = vsub.f32 %v2149, %v2150
    %v2152 = vsub.f32 %v2112, %v2135
    %v2153 = vsub.f32 %v2115, %v2135
    %v2154 = vsub.f32 %v2120, %v2135
    %v2155 = vsub.f32 %v2123, %v2135
    %v2156 = vadd.f32 %v2151, 1e-05
    %v2157 = vrsqrt.pop %v2156
    %v2158 = vmul.f32 %v2152, %v2157
    %v2159 = vmul.f32 %v2153, %v2157
    %v2160 = vmul.f32 %v2154, %v2157
    %v2161 = vmul.f32 %v2155, %v2157
    %v2162 = vld [vmem:[%s11] sm:$0x1]
    %v2164 = vlaneseq
    %v2165 = vshrl.u32 %v2164, 7
    %v2166 = vsub.s32 0, %v2165
    %v2167 = vrot.slane %v2162, %v2166
    %v2169 = vmul.f32 %v2158, %v2167
    %v2170 = vmul.f32 %v2159, %v2167
    %v2171 = vmul.f32 %v2160, %v2167
    %v2172 = vmul.f32 %v2161, %v2167
    %v2173 = vld [vmem:[%s12] sm:$0x1]
    %v2175 = vlaneseq
    %v2176 = vshrl.u32 %v2175, 7
    %v2177 = vsub.s32 0, %v2176
    %v2178 = vrot.slane %v2173, %v2177
    %v2180 = vadd.f32 %v2169, %v2178
    %v2181 = vadd.f32 %v2170, %v2178
    %v2182 = vadd.f32 %v2171, %v2178
    %v2183 = vadd.f32 %v2172, %v2178
    %v2184 = vmax.f32 %v2180, 0.0
    %v2185 = vmax.f32 %v2181, 0.0
    %v2186 = vmax.f32 %v2182, 0.0
    %v2187 = vmax.f32 %v2183, 0.0
    %v2188 = vadd.f32 %v2184, %v2185
    %v2189 = vrot.slane %v2188, 4
    %v2190 = vadd.f32 %v2188, %v2189
    %v2191 = vrot.slane %v2190, 2
    %v2192 = vadd.f32 %v2190, %v2191
    %v2193 = vrot.slane %v2192, 1
    %v2194 = vadd.f32 %v2192, %v2193
    %v2195 = vadd.f32 %v2186, %v2187
    %v2196 = vrot.slane %v2195, 4
    %v2197 = vadd.f32 %v2195, %v2196
    %v2198 = vrot.slane %v2197, 2
    %v2199 = vadd.f32 %v2197, %v2198
    %v2200 = vrot.slane %v2199, 1
    %v2201 = vadd.f32 %v2199, %v2200
    %v2202 = vrcp.pop 16.0
    %v2203 = vmul.f32 %v2194, %v2202
    %v2204 = vmul.f32 %v2201, %v2202
    %v2205 = vld [vmem:[#allocation11] sm:$0xff]
    %v2206 = vld [vmem:[#allocation11 + $0x8] sm:$0xff]
    %v2207 = vld [vmem:[#allocation11 + $0x10] sm:$0xff]
    %v2208 = vld [vmem:[#allocation11 + $0x18] sm:$0xff]
    %v2209 = vld [vmem:[#allocation11 + $0x20] sm:$0xff]
    %v2210 = vld [vmem:[#allocation11 + $0x28] sm:$0xff]
    %v2211 = vld [vmem:[#allocation11 + $0x30] sm:$0xff]
    %v2212 = vld [vmem:[#allocation11 + $0x38] sm:$0xff]
    %v2213 = vld [vmem:[#allocation11 + $0x40] sm:$0xff]
    %v2214 = vld [vmem:[#allocation11 + $0x48] sm:$0xff]
    %v2215 = vld [vmem:[#allocation11 + $0x50] sm:$0xff]
    %v2216 = vld [vmem:[#allocation11 + $0x58] sm:$0xff]
    %v2217 = vld [vmem:[#allocation11 + $0x60] sm:$0xff]
    %v2218 = vld [vmem:[#allocation11 + $0x68] sm:$0xff]
    %v2219 = vld [vmem:[#allocation11 + $0x70] sm:$0xff]
    %v2220 = vld [vmem:[#allocation11 + $0x78] sm:$0xff]
    %v2221 = vld [vmem:[%s14] sm:$0x1]
    %v2223 = vlaneseq
    %v2224 = vshrl.u32 %v2223, 7
    %v2225 = vsub.s32 0, %v2224
    %v2226 = vrot.slane %v2221, %v2225
    %vm2230 = vcmask 1041409
    %v2231 = vsel %vm2230, %v2204, %v2203
    %2233 = vmatprep.subr.mxu0 0.0
    %2234 = vmatpush1.msra.mxu0 %v2205
    %2235 = vmatprep.subr.mxu0 0.0
    %2236 = vmatpush1.msra.mxu0 %v2206
    %2237 = vmatprep.subr.mxu0 0.0
    %2238 = vmatpush1.msra.mxu0 %v2207
    %2239 = vmatprep.subr.mxu0 0.0
    %2240 = vmatpush1.msra.mxu0 %v2208
    %2241 = vmatprep.subr.mxu0 0.0
    %2242 = vmatpush1.msra.mxu0 %v2209
    %2243 = vmatprep.subr.mxu0 0.0
    %2244 = vmatpush1.msra.mxu0 %v2210
    %2245 = vmatprep.subr.mxu0 0.0
    %2246 = vmatpush1.msra.mxu0 %v2211
    %2247 = vmatprep.subr.mxu0 0.0
    %2248 = vmatpush1.msra.mxu0 %v2212
    %2249 = vmatprep.subr.mxu0 0.0
    %2250 = vmatpush1.msra.mxu0 %v2213
    %2251 = vmatprep.subr.mxu0 0.0
    %2252 = vmatpush1.msra.mxu0 %v2214
    %2253 = vmatprep.subr.mxu0 0.0
    %2254 = vmatpush1.msra.mxu0 %v2215
    %2255 = vmatprep.subr.mxu0 0.0
    %2256 = vmatpush1.msra.mxu0 %v2216
    %2257 = vmatprep.subr.mxu0 0.0
    %2258 = vmatpush1.msra.mxu0 %v2217
    %2259 = vmatprep.subr.mxu0 0.0
    %2260 = vmatpush1.msra.mxu0 %v2218
    %2261 = vmatprep.subr.mxu0 0.0
    %2262 = vmatpush1.msra.mxu0 %v2219
    %2263 = vmatprep.subr.mxu0 0.0
    %2264 = vmatpush1.msra.mxu0 %v2220
    %2265 = vmatprep.subr.mxu0 0.0
    %2266 = vmatpush1.msra.mxu0 0.0
    %2267 = vmatprep.subr.mxu0 0.0
    %2268 = vmatpush1.msra.mxu0 0.0
    %2269 = vmatprep.subr.mxu0 0.0
    %2270 = vmatpush1.msra.mxu0 0.0
    %2271 = vmatprep.subr.mxu0 0.0
    %2272 = vmatpush1.msra.mxu0 0.0
    %2273 = vmatprep.subr.mxu0 0.0
    %2274 = vmatpush1.msra.mxu0 0.0
    %2275 = vmatprep.subr.mxu0 0.0
    %2276 = vmatpush1.msra.mxu0 0.0
    %2277 = vmatprep.subr.mxu0 0.0
    %2278 = vmatpush1.msra.mxu0 0.0
    %2279 = vmatprep.subr.mxu0 0.0
    %2280 = vmatpush1.msra.mxu0 0.0
    %2281 = vmatprep.subr.mxu0 0.0
    %2282 = vmatpush1.msra.mxu0 0.0
    %2283 = vmatprep.subr.mxu0 0.0
    %2284 = vmatpush1.msra.mxu0 0.0
    %2285 = vmatprep.subr.mxu0 0.0
    %2286 = vmatpush1.msra.mxu0 0.0
    %2287 = vmatprep.subr.mxu0 0.0
    %2288 = vmatpush1.msra.mxu0 0.0
    %2289 = vmatprep.subr.mxu0 0.0
    %2290 = vmatpush1.msra.mxu0 0.0
    %2291 = vmatprep.subr.mxu0 0.0
    %2292 = vmatpush1.msra.mxu0 0.0
    %2293 = vmatprep.subr.mxu0 0.0
    %2294 = vmatpush1.msra.mxu0 0.0
    %2295 = vmatprep.subr.mxu0 0.0
    %2296 = vmatpush1.msra.mxu0 0.0
    %2297 = vmatprep.mubr.f32.mxu0 0.0
    %2298 = vmatmul.mubr.f32.gmra.mrb[0].mxu0 %v2231
    %v2299 = vpop.f32.mrb[0].mxu0
    %v2300 = vadd.f32 %v2226, %v2299
    %v2301 = vpop.f32.mrb[0].mxu0
    %2302 = vdwg.mxu0
    %2303 = vst [vmem:[#allocation12] sm:$0x3] %v2300
    // Predicated region
    $region82: #{tpu_custom_call.1} parent=1 // pred_check
      _
    $region83: #{tpu_custom_call.1} parent=1 // pred_check_branch
      %2305 = sbr.rel (0) target = $region85
    $region84: #{tpu_custom_call.1} parent=1 // pred_region
      %s2307 = ssub.s32 32, 32
      %2308 = vsyncadd [#allocation5], %s2307
      %s2310 = sshll.u32 [#allocation12], 4
      %s2311 = int_to_ptr.vmem [resolvable:$true] %s2310
      %2313 = dma.vmem_to_hbm [thread:$0]  %s2311, 32, %s15, [#allocation5]
    $region85: #{tpu_custom_call.1} parent=1 // pred_fallthru
      _
    // Predicated region
    $region86: #{tpu_custom_call.1} parent=1 // pred_check
      _
    $region87: #{tpu_custom_call.1} parent=1 // pred_check_branch
      %2315 = sbr.rel (0) target = $region89
    $region88: #{tpu_custom_call.1} parent=1 // pred_region
      %2316 = dma.done [#allocation5], 32
    $region89: #{tpu_custom_call.1} parent=1 // pred_fallthru
      _
    %2317 = vsyncpa [#allocation4], 1
    %2318 = vsyncpa [#allocation7], 1
    %2319 = vsyncpa [#allocation10], 1
    %2320 = vsyncpa [#allocation5], 1

</llo_original>
